<compile_context>
chip_gen: v6e
topology: v6e:2x2x1
jax: 0.10.0
libtpu: 0.0.40
codegen_flags: <defaults>
</compile_context>

<pallas_src>
import jax
import jax.numpy as jnp
from jax import lax
from jax.experimental import pallas as pl
from jax.experimental.pallas import tpu as pltpu

BETA = 0.5  # stands in for args.beta


# ----------------------------- Pallas kernels ------------------------------

def _make_conv1_pool_kernel(beta, n_imgs, n_pos):
    """conv1 (single lane-dense matmul) + bias + ReLU + L1 stats, then 2x2/2
    max-pool as a max over the 4 tap-major column blocks + L2 stats."""
    blk = n_imgs * n_pos                               # columns per pool tap

    def kernel(pat_ref, w_ref, b_ref,
               pooled_ref, smap1_ref, smap2_ref, zeros_ref, tanh_ref):
        # conv[c, p*blk + n*n_pos + m]: one (6,25)x(25,4N*144) MXU matmul
        conv = jnp.dot(w_ref[...], pat_ref[...],
                       preferred_element_type=jnp.float32)
        conv = jnp.maximum(conv + b_ref[...], 0.0)     # (OC,1) lane-broadcast

        z1 = (conv == 0.0).astype(jnp.int32)
        smap1_ref[...] = z1.astype(jnp.uint8)          # lane-dense (6, 4N*144)
        zeros_ref[0] = jnp.sum(z1)
        tanh_ref[0] = jnp.sum(jnp.tanh(beta * conv))

        # MaxPool2d(2,2): max over the 4 tap-major column blocks
        pooled = conv[:, 0:blk]
        for p in range(1, 4):
            pooled = jnp.maximum(pooled, conv[:, p * blk:(p + 1) * blk])
        pooled_ref[...] = pooled                       # (6, N*144), cols (n, m)

        z2 = (pooled == 0.0).astype(jnp.int32)
        smap2_ref[...] = z2.astype(jnp.uint8)
        zeros_ref[1] = jnp.sum(z2)
        tanh_ref[1] = jnp.sum(jnp.tanh(beta * pooled))
    return kernel


def _make_conv2_fc_kernel(beta, n_imgs, n_pos, n_ch):
    """conv2 + ReLU + L3 stats, pool2 + L4 stats, then fc1->fc2->fc3 (ReLU +
    stats after each), all fused; the pool2/flat activation never leaves VMEM."""

    def kernel(pat_ref, wc_ref, bc_ref, w1_ref, b1_ref, w2_ref, b2_ref,
               w3_ref, b3_ref,
               out_ref, smap3_ref, smap4_ref, smap5_ref, smap6_ref, smap7_ref,
               zeros_ref, tanh_ref, flat_ref):
        # conv[oc, n*4*n_pos + p*n_pos + m]: one (16,150)x(150,4N*16) matmul
        conv = jnp.dot(wc_ref[...], pat_ref[...],
                       preferred_element_type=jnp.float32)
        conv = jnp.maximum(conv + bc_ref[...], 0.0)

        z3 = (conv == 0.0).astype(jnp.int32)
        smap3_ref[...] = z3.astype(jnp.uint8)          # lane-dense (16, 4N*16)
        zeros_ref[0] = jnp.sum(z3)
        tanh_ref[0] = jnp.sum(jnp.tanh(beta * conv))

        # pool2 + flatten straight into torch .view(N, -1) order inside VMEM.
        # The oc-major flatten is a cross-tile relayout; a few small static
        # stores into a VMEM scratch are cheap here and always lower cleanly.
        for n in range(n_imgs):
            base = n * 4 * n_pos
            pn = conv[:, base:base + n_pos]
            for p in range(1, 4):
                pn = jnp.maximum(
                    pn, conv[:, base + p * n_pos: base + (p + 1) * n_pos])
            for c in range(n_ch):                      # flat[n, c*16 + m]
                flat_ref[n:n + 1, c * n_pos:(c + 1) * n_pos] = pn[c:c + 1, :]
        flat = flat_ref[...]                           # (N, 256)

        z4 = (flat == 0.0).astype(jnp.int32)
        smap4_ref[...] = z4.astype(jnp.uint8)          # lane-dense (N, 256)
        zeros_ref[1] = jnp.sum(z4)
        tanh_ref[1] = jnp.sum(jnp.tanh(beta * flat))

        def fc(h, w_ref, b_ref):
            # torch (out,in) weight, contracted on dim 1 in-kernel (no wrapper .T)
            y = lax.dot_general(h, w_ref[...], (((1,), (1,)), ((), ())),
                                preferred_element_type=jnp.float32)
            return jnp.maximum(y + b_ref[...], 0.0)

        def stats(i, act, smap_ref):
            z = (act == 0.0).astype(jnp.int32)
            smap_ref[...] = z.astype(jnp.uint8)
            zeros_ref[i] = jnp.sum(z)
            tanh_ref[i] = jnp.sum(jnp.tanh(beta * act))

        h = fc(flat, w1_ref, b1_ref)                   # (N, 120)
        stats(2, h, smap5_ref)
        h = fc(h, w2_ref, b2_ref)                      # (N, 84)
        stats(3, h, smap6_ref)
        h = fc(h, w3_ref, b3_ref)                      # (N, 10); relu5 per spec
        stats(4, h, smap7_ref)
        out_ref[...] = h
    return kernel


# --------------------------- pallas_call wrappers ---------------------------

def _spec2d(shape):
    return pl.BlockSpec(shape, lambda i: (0, 0))


def _conv1_block(pat, w, b, n_imgs, beta):
    """pat: (25, 4N*144) cols (p, n, m); w: (6, 25); b: (6, 1)."""
    K, ncols = pat.shape
    OC = w.shape[0]
    n_pos = ncols // (4 * n_imgs)
    blk = n_imgs * n_pos
    return pl.pallas_call(
        _make_conv1_pool_kernel(beta, n_imgs, n_pos),
        grid=(1,),
        in_specs=[_spec2d((K, ncols)), _spec2d((OC, K)), _spec2d((OC, 1))],
        out_specs=(_spec2d((OC, blk)),
                   _spec2d((OC, ncols)),
                   _spec2d((OC, blk)),
                   pl.BlockSpec(memory_space=pltpu.SMEM),
                   pl.BlockSpec(memory_space=pltpu.SMEM)),
        out_shape=(jax.ShapeDtypeStruct((OC, blk), jnp.float32),   # pool1 act
                   jax.ShapeDtypeStruct((OC, ncols), jnp.uint8),   # L1 smap
                   jax.ShapeDtypeStruct((OC, blk), jnp.uint8),     # L2 smap
                   jax.ShapeDtypeStruct((2,), jnp.int32),          # zero counts
                   jax.ShapeDtypeStruct((2,), jnp.float32)),       # tanh sums
        compiler_params=pltpu.CompilerParams(
            dimension_semantics=("arbitrary",),
            allow_input_fusion=[True, False, False]),
    )(pat, w, b)


def _conv2_fc_block(pat, wc, bc, w1, b1, w2, b2, w3, b3, n_imgs, beta):
    """pat: (150, 4N*16) cols (n, p, m); wc: (16, 150); bc: (16, 1);
    FC weights untransposed (torch (out, in)); FC biases (1, D)."""
    K, ncols = pat.shape
    OC = wc.shape[0]
    n_pos = ncols // (4 * n_imgs)
    flat_dim = OC * n_pos                                # 256
    D1, D2, D3 = w1.shape[0], w2.shape[0], w3.shape[0]
    inputs = (pat, wc, bc, w1, b1, w2, b2, w3, b3)
    return pl.pallas_call(
        _make_conv2_fc_kernel(beta, n_imgs, n_pos, OC),
        grid=(1,),
        in_specs=[_spec2d(a.shape) for a in inputs],
        out_specs=(_spec2d((n_imgs, D3)),
                   _spec2d((OC, ncols)),
                   _spec2d((n_imgs, flat_dim)),
                   _spec2d((n_imgs, D1)),
                   _spec2d((n_imgs, D2)),
                   _spec2d((n_imgs, D3)),
                   pl.BlockSpec(memory_space=pltpu.SMEM),
                   pl.BlockSpec(memory_space=pltpu.SMEM)),
        out_shape=(jax.ShapeDtypeStruct((n_imgs, D3), jnp.float32),     # logits
                   jax.ShapeDtypeStruct((OC, ncols), jnp.uint8),        # L3 smap
                   jax.ShapeDtypeStruct((n_imgs, flat_dim), jnp.uint8), # L4 smap
                   jax.ShapeDtypeStruct((n_imgs, D1), jnp.uint8),       # L5 smap
                   jax.ShapeDtypeStruct((n_imgs, D2), jnp.uint8),       # L6 smap
                   jax.ShapeDtypeStruct((n_imgs, D3), jnp.uint8),       # L7 smap
                   jax.ShapeDtypeStruct((5,), jnp.int32),
                   jax.ShapeDtypeStruct((5,), jnp.float32)),
        scratch_shapes=[pltpu.VMEM((n_imgs, flat_dim), jnp.float32)],
        compiler_params=pltpu.CompilerParams(
            dimension_semantics=("arbitrary",),
            allow_input_fusion=[True] + [False] * 8),
    )(*inputs)


# ------------------------------ XLA input prep ------------------------------

def _im2col_taps(x, tap_major):
    """x: (N, C, H, W) -> (C*25, cols) patch matrix for a 5x5 VALID conv whose
    output will be 2x2/2 max-pooled.  Columns are (p, n, m) if tap_major else
    (n, p, m), with p = pi*2+pj the pool-tap index and m = ohp*PW + owp the
    pooled-grid position.  Rows are c*25 + ki*5 + kj (matches w.reshape(OC,-1)).
    Pure XLA glue; allow_input_fusion lets it fuse into the kernel's input DMA."""
    N, C, H, W = x.shape
    OH, OW = H - 4, W - 4
    PH, PW = OH // 2, OW // 2
    slabs = jnp.stack([x[:, :, ki:ki + OH, kj:kj + OW]
                       for ki in range(5) for kj in range(5)], axis=2)
    # slabs: (N, C, 25, OH, OW)
    taps = jnp.stack([slabs[:, :, :, pi::2, pj::2]
                      for pi in range(2) for pj in range(2)], axis=0)
    # taps: (4, N, C, 25, PH, PW)
    if tap_major:
        t = taps.transpose(2, 3, 0, 1, 4, 5)          # (C, 25, 4, N, PH, PW)
    else:
        t = taps.transpose(2, 3, 1, 0, 4, 5)          # (C, 25, N, 4, PH, PW)
    return t.reshape(C * 25, -1)


# ------------------------------- model glue ---------------------------------

def init_params(key):
    def uni(k, shape, fan_in):
        bound = 1.0 / jnp.sqrt(fan_in)
        return jax.random.uniform(k, shape, jnp.float32, -bound, bound)
    ks = jax.random.split(key, 10)
    return dict(
        conv1_w=uni(ks[0], (6, 1, 5, 5), 1 * 5 * 5),
        conv1_b=uni(ks[1], (6,), 1 * 5 * 5),
        conv2_w=uni(ks[2], (16, 6, 5, 5), 6 * 5 * 5),
        conv2_b=uni(ks[3], (16,), 6 * 5 * 5),
        fc1_w=uni(ks[4], (120, 256), 256), fc1_b=uni(ks[5], (120,), 256),
        fc2_w=uni(ks[6], (84, 120), 120),  fc2_b=uni(ks[7], (84,), 120),
        fc3_w=uni(ks[8], (10, 84), 84),    fc3_b=uni(ks[9], (10,), 84),
    )


def lenet5_forward(x, p, beta=BETA):
    N = x.shape[0]

    # conv1 + ReLU + L1 stats + pool1 + L2 stats : pallas_call #1
    pat1 = _im2col_taps(x, tap_major=True)             # (25, 4N*144), cols (p,n,m)
    pooled1, smap1, smap2, zc12, th12 = _conv1_block(
        pat1, p["conv1_w"].reshape(6, 25), p["conv1_b"].reshape(6, 1), N, beta)

    # conv2 + L3 + pool2 + L4 + fc1/fc2/fc3 + L5/L6/L7 : pallas_call #2
    a2 = pooled1.reshape(6, N, 12, 12).transpose(1, 0, 2, 3)   # (N, 6, 12, 12)
    pat2 = _im2col_taps(a2, tap_major=False)           # (150, 4N*16), cols (n,p,m)
    (logits, smap3, smap4, smap5, smap6, smap7, zc3_7, th3_7) = _conv2_fc_block(
        pat2, p["conv2_w"].reshape(16, 150), p["conv2_b"].reshape(16, 1),
        p["fc1_w"], p["fc1_b"].reshape(1, -1),
        p["fc2_w"], p["fc2_b"].reshape(1, -1),
        p["fc3_w"], p["fc3_b"].reshape(1, -1), N, beta)

    sizes = (N * 6 * 24 * 24, N * 6 * 12 * 12, N * 16 * 8 * 8, N * 16 * 4 * 4,
             N * 120, N * 84, N * 10)
    tanh_total = -(th12[0] + th12[1] + th3_7[0] + th3_7[1]
                   + th3_7[2] + th3_7[3] + th3_7[4]) / sum(sizes)

    # restore the reference's NCHW flatten order for the sparsity maps (uint8 glue)
    sm1 = smap1.reshape(6, 2, 2, N, 12, 12).transpose(3, 0, 4, 1, 5, 2).reshape(-1)
    sm2 = smap2.reshape(6, N, 12, 12).transpose(1, 0, 2, 3).reshape(-1)
    sm3 = smap3.reshape(16, N, 2, 2, 4, 4).transpose(1, 0, 4, 2, 5, 3).reshape(-1)
    sparsity_map_total = jnp.concatenate(
        [sm1, sm2, sm3, smap4.reshape(-1), smap5.reshape(-1),
         smap6.reshape(-1), smap7.reshape(-1)], axis=0)

    return (logits,
            zc12[0], sizes[0], zc12[1], sizes[1],
            zc3_7[0], sizes[2], zc3_7[1], sizes[3],
            zc3_7[2], sizes[4], zc3_7[3], sizes[5], zc3_7[4], sizes[6],
            tanh_total, sparsity_map_total,
            0, 0, 0)  # sum(pow_dnmc), sum(pow_stat), sum(num_cycles) w/ power=False


# ------------------------- plain-XLA reference check ------------------------

def _reference_forward(x, p):
    hp = lax.Precision.HIGHEST

    def conv(inp, w, b):
        out = lax.conv_general_dilated(
            inp, w, (1, 1), "VALID",
            dimension_numbers=("NCHW", "OIHW", "NCHW"), precision=hp)
        return jnp.maximum(out + b.reshape(1, -1, 1, 1), 0.0)

    def pool(inp):
        return lax.reduce_window(inp, -jnp.inf, lax.max,
                                 (1, 1, 2, 2), (1, 1, 2, 2), "VALID")

    a1 = conv(x, p["conv1_w"], p["conv1_b"]); a2 = pool(a1)
    a3 = conv(a2, p["conv2_w"], p["conv2_b"]); a4 = pool(a3)
    f = a4.reshape(a4.shape[0], -1)
    a5 = jnp.maximum(jnp.dot(f, p["fc1_w"].T, precision=hp) + p["fc1_b"], 0.0)
    a6 = jnp.maximum(jnp.dot(a5, p["fc2_w"].T, precision=hp) + p["fc2_b"], 0.0)
    a7 = jnp.maximum(jnp.dot(a6, p["fc3_w"].T, precision=hp) + p["fc3_b"], 0.0)
    smap = jnp.concatenate([(a == 0.0).astype(jnp.uint8).reshape(-1)
                            for a in (a1, a2, a3, a4, a5, a6, a7)])
    return a7, smap


if __name__ == "__main__":
    key = jax.random.PRNGKey(0)
    kx, kp = jax.random.split(key)
    # fc1 = Linear(256, 120) implies a 28x28 single-channel (MNIST) input; batch 2.
    x = jax.random.normal(kx, (2, 1, 28, 28), dtype=jnp.float32)
    params = init_params(kp)

    fwd = jax.jit(lenet5_forward)
    outs = fwd(x, params)
    logits, tanh_total, smap_total = outs[0], outs[15], outs[16]
    jax.block_until_ready(logits)
    jax.block_until_ready(tanh_total)
    jax.block_until_ready(smap_total)

    assert logits.shape == (2, 10)
    expected_len = (2 * 6 * 24 * 24 + 2 * 6 * 12 * 12 + 2 * 16 * 8 * 8
                    + 2 * 16 * 4 * 4 + 2 * 120 + 2 * 84 + 2 * 10)
    assert smap_total.shape == (expected_len,) and smap_total.dtype == jnp.uint8

    # numerical sanity check vs a plain-XLA reference (loose tolerance to
    # accommodate MXU/XLA precision differences; catches plumbing/order bugs)
    ref_logits, ref_smap = _reference_forward(x, params)
    assert jnp.allclose(logits, ref_logits, atol=3e-2, rtol=3e-2)
    agree = jnp.mean((smap_total == ref_smap).astype(jnp.float32))
    assert float(agree) > 0.98

    print("KERNEL_OK")
</pallas_src>

<mosaic_0001>
module attributes {stable_mosaic.version = 11 : i64} {
  func.func @kernel(%arg0: i32, %arg1: memref<25x1152xf32, #tpu.memory_space<vmem>>, %arg2: memref<6x25xf32, #tpu.memory_space<vmem>>, %arg3: memref<6x1xf32, #tpu.memory_space<vmem>>, %arg4: memref<6x288xf32, #tpu.memory_space<vmem>>, %arg5: memref<6x1152xi8, #tpu.memory_space<vmem>>, %arg6: memref<6x288xi8, #tpu.memory_space<vmem>>, %arg7: memref<2xi32, #tpu.memory_space<smem>>, %arg8: memref<2xf32, #tpu.memory_space<smem>>) attributes {dimension_semantics = [#tpu.dimension_semantics<arbitrary>], iteration_bounds = array<i64: 1>, scalar_prefetch = 0 : i64, scratch_operands = 0 : i64, tpu.core_type = #tpu.core_type<tc>, window_params = [{pipeline_mode = #tpu.pipeline_mode<synchronous>, transform_indices = @transform_0, window_bounds = array<i64: 25, 1152>}, {pipeline_mode = #tpu.pipeline_mode<synchronous>, transform_indices = @transform_1, window_bounds = array<i64: 6, 25>}, {pipeline_mode = #tpu.pipeline_mode<synchronous>, transform_indices = @transform_2, window_bounds = array<i64: 6, 1>}, {pipeline_mode = #tpu.pipeline_mode<synchronous>, transform_indices = @transform_3, window_bounds = array<i64: 6, 288>}, {pipeline_mode = #tpu.pipeline_mode<synchronous>, transform_indices = @transform_4, window_bounds = array<i64: 6, 1152>}, {pipeline_mode = #tpu.pipeline_mode<synchronous>, transform_indices = @transform_5, window_bounds = array<i64: 6, 288>}, {transform_indices = @transform_6, window_bounds = array<i64: 2>}, {transform_indices = @transform_7, window_bounds = array<i64: 2>}]} {
    %c0 = arith.constant 0 : index
    %c0_0 = arith.constant 0 : index
    %0 = vector.load %arg2[%c0, %c0_0] : memref<6x25xf32, #tpu.memory_space<vmem>>, vector<6x25xf32>
    %c0_1 = arith.constant 0 : index
    %c0_2 = arith.constant 0 : index
    %1 = vector.load %arg1[%c0_1, %c0_2] : memref<25x1152xf32, #tpu.memory_space<vmem>>, vector<25x1152xf32>
    %cst = arith.constant dense<0.000000e+00> : vector<6x1152xf32>
    %2 = tpu.matmul %0, %1, %cst {dimension_numbers = #tpu.dot_dimension_numbers<[1], [0], [0], [1], [0, 0, 1, 1], [], []>} : vector<6x25xf32>, vector<25x1152xf32>, vector<6x1152xf32> -> vector<6x1152xf32>
    %c0_3 = arith.constant 0 : index
    %c0_4 = arith.constant 0 : index
    %3 = vector.load %arg3[%c0_3, %c0_4] : memref<6x1xf32, #tpu.memory_space<vmem>>, vector<6x1xf32>
    %4 = vector.broadcast %3 : vector<6x1xf32> to vector<6x1152xf32>
    %5 = arith.addf %2, %4 : vector<6x1152xf32>
    %cst_5 = arith.constant 0.000000e+00 : f32
    %6 = vector.broadcast %cst_5 : f32 to vector<6x1152xf32>
    %7 = arith.maximumf %5, %6 : vector<6x1152xf32>
    %cst_6 = arith.constant 0.000000e+00 : f32
    %8 = vector.broadcast %cst_6 : f32 to vector<6x1152xf32>
    %9 = arith.cmpf oeq, %7, %8 : vector<6x1152xf32>
    %10 = arith.extui %9 : vector<6x1152xi1> to vector<6x1152xi32>
    %11 = arith.trunci %10 : vector<6x1152xi32> to vector<6x1152xi8>
    %c0_7 = arith.constant 0 : index
    %c0_8 = arith.constant 0 : index
    %12 = vector.load %arg5[%c0_7, %c0_8] : memref<6x1152xi8, #tpu.memory_space<vmem>>, vector<6x1152xi8>
    tpu.vector_store %arg5[%c0_7, %c0_8], %11 {strides = array<i32>} : memref<6x1152xi8, #tpu.memory_space<vmem>>, vector<6x1152xi8>,
    %13 = vector.shape_cast %10 : vector<6x1152xi32> to vector<1x6x1152xi32>
    %cst_9 = arith.constant dense<0> : vector<1xi32>
    %14 = vector.multi_reduction <add>, %13, %cst_9 [1, 2] : vector<1x6x1152xi32> to vector<1xi32>
    %15 = vector.shape_cast %14 : vector<1xi32> to vector<1x1x1xi32>
    %16 = vector.extract %15[0, 0, 0] : i32 from vector<1x1x1xi32>
    %c0_10 = arith.constant 0 : index
    %17 = memref.load %arg7[%c0_10] : memref<2xi32, #tpu.memory_space<smem>>
    memref.store %16, %arg7[%c0_10] : memref<2xi32, #tpu.memory_space<smem>>
    %cst_11 = arith.constant 5.000000e-01 : f32
    %18 = vector.broadcast %cst_11 : f32 to vector<6x1152xf32>
    %19 = arith.mulf %18, %7 : vector<6x1152xf32>
    %20 = math.tanh %19 : vector<6x1152xf32>
    %21 = vector.shape_cast %20 : vector<6x1152xf32> to vector<1x6x1152xf32>
    %cst_12 = arith.constant dense<0.000000e+00> : vector<1xf32>
    %22 = vector.multi_reduction <add>, %21, %cst_12 [1, 2] : vector<1x6x1152xf32> to vector<1xf32>
    %23 = vector.shape_cast %22 : vector<1xf32> to vector<1x1x1xf32>
    %24 = vector.extract %23[0, 0, 0] : f32 from vector<1x1x1xf32>
    %c0_13 = arith.constant 0 : index
    %25 = memref.load %arg8[%c0_13] : memref<2xf32, #tpu.memory_space<smem>>
    memref.store %24, %arg8[%c0_13] : memref<2xf32, #tpu.memory_space<smem>>
    %26 = vector.extract_strided_slice %7 {offsets = [0, 0], sizes = [6, 288], strides = [1, 1]} : vector<6x1152xf32> to vector<6x288xf32>
    %27 = vector.extract_strided_slice %7 {offsets = [0, 288], sizes = [6, 288], strides = [1, 1]} : vector<6x1152xf32> to vector<6x288xf32>
    %28 = arith.maximumf %26, %27 : vector<6x288xf32>
    %29 = vector.extract_strided_slice %7 {offsets = [0, 576], sizes = [6, 288], strides = [1, 1]} : vector<6x1152xf32> to vector<6x288xf32>
    %30 = arith.maximumf %28, %29 : vector<6x288xf32>
    %31 = vector.extract_strided_slice %7 {offsets = [0, 864], sizes = [6, 288], strides = [1, 1]} : vector<6x1152xf32> to vector<6x288xf32>
    %32 = arith.maximumf %30, %31 : vector<6x288xf32>
    %c0_14 = arith.constant 0 : index
    %c0_15 = arith.constant 0 : index
    %33 = vector.load %arg4[%c0_14, %c0_15] : memref<6x288xf32, #tpu.memory_space<vmem>>, vector<6x288xf32>
    tpu.vector_store %arg4[%c0_14, %c0_15], %32 {strides = array<i32>} : memref<6x288xf32, #tpu.memory_space<vmem>>, vector<6x288xf32>,
    %cst_16 = arith.constant 0.000000e+00 : f32
    %34 = vector.broadcast %cst_16 : f32 to vector<6x288xf32>
    %35 = arith.cmpf oeq, %32, %34 : vector<6x288xf32>
    %36 = arith.extui %35 : vector<6x288xi1> to vector<6x288xi32>
    %37 = arith.trunci %36 : vector<6x288xi32> to vector<6x288xi8>
    %c0_17 = arith.constant 0 : index
    %c0_18 = arith.constant 0 : index
    %38 = vector.load %arg6[%c0_17, %c0_18] : memref<6x288xi8, #tpu.memory_space<vmem>>, vector<6x288xi8>
    tpu.vector_store %arg6[%c0_17, %c0_18], %37 {strides = array<i32>} : memref<6x288xi8, #tpu.memory_space<vmem>>, vector<6x288xi8>,
    %39 = vector.shape_cast %36 : vector<6x288xi32> to vector<1x6x288xi32>
    %cst_19 = arith.constant dense<0> : vector<1xi32>
    %40 = vector.multi_reduction <add>, %39, %cst_19 [1, 2] : vector<1x6x288xi32> to vector<1xi32>
    %41 = vector.shape_cast %40 : vector<1xi32> to vector<1x1x1xi32>
    %42 = vector.extract %41[0, 0, 0] : i32 from vector<1x1x1xi32>
    %c1 = arith.constant 1 : index
    %43 = memref.load %arg7[%c1] : memref<2xi32, #tpu.memory_space<smem>>
    memref.store %42, %arg7[%c1] : memref<2xi32, #tpu.memory_space<smem>>
    %cst_20 = arith.constant 5.000000e-01 : f32
    %44 = vector.broadcast %cst_20 : f32 to vector<6x288xf32>
    %45 = arith.mulf %44, %32 : vector<6x288xf32>
    %46 = math.tanh %45 : vector<6x288xf32>
    %47 = vector.shape_cast %46 : vector<6x288xf32> to vector<1x6x288xf32>
    %cst_21 = arith.constant dense<0.000000e+00> : vector<1xf32>
    %48 = vector.multi_reduction <add>, %47, %cst_21 [1, 2] : vector<1x6x288xf32> to vector<1xf32>
    %49 = vector.shape_cast %48 : vector<1xf32> to vector<1x1x1xf32>
    %50 = vector.extract %49[0, 0, 0] : f32 from vector<1x1x1xf32>
    %c1_22 = arith.constant 1 : index
    %51 = memref.load %arg8[%c1_22] : memref<2xf32, #tpu.memory_space<smem>>
    memref.store %50, %arg8[%c1_22] : memref<2xf32, #tpu.memory_space<smem>>
    return
  }
  func.func @transform_0(%arg0: i32) -> (i32, i32) {
    %c0_i32 = arith.constant 0 : i32
    %c0_i32_0 = arith.constant 0 : i32
    %c0_i32_1 = arith.constant 0 : i32
    return %c0_i32, %c0_i32_0 : i32, i32
  }
  func.func @transform_1(%arg0: i32) -> (i32, i32) {
    %c0_i32 = arith.constant 0 : i32
    %c0_i32_0 = arith.constant 0 : i32
    %c0_i32_1 = arith.constant 0 : i32
    return %c0_i32, %c0_i32_0 : i32, i32
  }
  func.func @transform_2(%arg0: i32) -> (i32, i32) {
    %c0_i32 = arith.constant 0 : i32
    %c0_i32_0 = arith.constant 0 : i32
    %c0_i32_1 = arith.constant 0 : i32
    return %c0_i32, %c0_i32_0 : i32, i32
  }
  func.func @transform_3(%arg0: i32) -> (i32, i32) {
    %c0_i32 = arith.constant 0 : i32
    %c0_i32_0 = arith.constant 0 : i32
    %c0_i32_1 = arith.constant 0 : i32
    return %c0_i32, %c0_i32_0 : i32, i32
  }
  func.func @transform_4(%arg0: i32) -> (i32, i32) {
    %c0_i32 = arith.constant 0 : i32
    %c0_i32_0 = arith.constant 0 : i32
    %c0_i32_1 = arith.constant 0 : i32
    return %c0_i32, %c0_i32_0 : i32, i32
  }
  func.func @transform_5(%arg0: i32) -> (i32, i32) {
    %c0_i32 = arith.constant 0 : i32
    %c0_i32_0 = arith.constant 0 : i32
    %c0_i32_1 = arith.constant 0 : i32
    return %c0_i32, %c0_i32_0 : i32, i32
  }
  func.func @transform_6(%arg0: i32) -> i32 {
    %c0_i32 = arith.constant 0 : i32
    %c0_i32_0 = arith.constant 0 : i32
    return %c0_i32 : i32
  }
  func.func @transform_7(%arg0: i32) -> i32 {
    %c0_i32 = arith.constant 0 : i32
    %c0_i32_0 = arith.constant 0 : i32
    return %c0_i32 : i32
  }
}

module attributes {stable_mosaic.version = 11 : i64} {
  func.func @kernel(%arg0: i32, %arg1: memref<150x128xf32, #tpu.memory_space<vmem>>, %arg2: memref<16x150xf32, #tpu.memory_space<vmem>>, %arg3: memref<16x1xf32, #tpu.memory_space<vmem>>, %arg4: memref<120x256xf32, #tpu.memory_space<vmem>>, %arg5: memref<1x120xf32, #tpu.memory_space<vmem>>, %arg6: memref<84x120xf32, #tpu.memory_space<vmem>>, %arg7: memref<1x84xf32, #tpu.memory_space<vmem>>, %arg8: memref<10x84xf32, #tpu.memory_space<vmem>>, %arg9: memref<1x10xf32, #tpu.memory_space<vmem>>, %arg10: memref<2x10xf32, #tpu.memory_space<vmem>>, %arg11: memref<16x128xi8, #tpu.memory_space<vmem>>, %arg12: memref<2x256xi8, #tpu.memory_space<vmem>>, %arg13: memref<2x120xi8, #tpu.memory_space<vmem>>, %arg14: memref<2x84xi8, #tpu.memory_space<vmem>>, %arg15: memref<2x10xi8, #tpu.memory_space<vmem>>, %arg16: memref<5xi32, #tpu.memory_space<smem>>, %arg17: memref<5xf32, #tpu.memory_space<smem>>, %arg18: memref<2x256xf32, #tpu.memory_space<vmem>>) attributes {dimension_semantics = [#tpu.dimension_semantics<arbitrary>], iteration_bounds = array<i64: 1>, scalar_prefetch = 0 : i64, scratch_operands = 1 : i64, tpu.core_type = #tpu.core_type<tc>, window_params = [{pipeline_mode = #tpu.pipeline_mode<synchronous>, transform_indices = @transform_0, window_bounds = array<i64: 150, 128>}, {pipeline_mode = #tpu.pipeline_mode<synchronous>, transform_indices = @transform_1, window_bounds = array<i64: 16, 150>}, {pipeline_mode = #tpu.pipeline_mode<synchronous>, transform_indices = @transform_2, window_bounds = array<i64: 16, 1>}, {pipeline_mode = #tpu.pipeline_mode<synchronous>, transform_indices = @transform_3, window_bounds = array<i64: 120, 256>}, {pipeline_mode = #tpu.pipeline_mode<synchronous>, transform_indices = @transform_4, window_bounds = array<i64: 1, 120>}, {pipeline_mode = #tpu.pipeline_mode<synchronous>, transform_indices = @transform_5, window_bounds = array<i64: 84, 120>}, {pipeline_mode = #tpu.pipeline_mode<synchronous>, transform_indices = @transform_6, window_bounds = array<i64: 1, 84>}, {pipeline_mode = #tpu.pipeline_mode<synchronous>, transform_indices = @transform_7, window_bounds = array<i64: 10, 84>}, {pipeline_mode = #tpu.pipeline_mode<synchronous>, transform_indices = @transform_8, window_bounds = array<i64: 1, 10>}, {pipeline_mode = #tpu.pipeline_mode<synchronous>, transform_indices = @transform_9, window_bounds = array<i64: 2, 10>}, {pipeline_mode = #tpu.pipeline_mode<synchronous>, transform_indices = @transform_10, window_bounds = array<i64: 16, 128>}, {pipeline_mode = #tpu.pipeline_mode<synchronous>, transform_indices = @transform_11, window_bounds = array<i64: 2, 256>}, {pipeline_mode = #tpu.pipeline_mode<synchronous>, transform_indices = @transform_12, window_bounds = array<i64: 2, 120>}, {pipeline_mode = #tpu.pipeline_mode<synchronous>, transform_indices = @transform_13, window_bounds = array<i64: 2, 84>}, {pipeline_mode = #tpu.pipeline_mode<synchronous>, transform_indices = @transform_14, window_bounds = array<i64: 2, 10>}, {transform_indices = @transform_15, window_bounds = array<i64: 5>}, {transform_indices = @transform_16, window_bounds = array<i64: 5>}]} {
    %c0 = arith.constant 0 : index
    %c0_0 = arith.constant 0 : index
    %0 = vector.load %arg2[%c0, %c0_0] : memref<16x150xf32, #tpu.memory_space<vmem>>, vector<16x150xf32>
    %c0_1 = arith.constant 0 : index
    %c0_2 = arith.constant 0 : index
    %1 = vector.load %arg1[%c0_1, %c0_2] : memref<150x128xf32, #tpu.memory_space<vmem>>, vector<150x128xf32>
    %cst = arith.constant dense<0.000000e+00> : vector<16x128xf32>
    %2 = tpu.matmul %0, %1, %cst {dimension_numbers = #tpu.dot_dimension_numbers<[1], [0], [0], [1], [0, 0, 1, 1], [], []>} : vector<16x150xf32>, vector<150x128xf32>, vector<16x128xf32> -> vector<16x128xf32>
    %c0_3 = arith.constant 0 : index
    %c0_4 = arith.constant 0 : index
    %3 = vector.load %arg3[%c0_3, %c0_4] : memref<16x1xf32, #tpu.memory_space<vmem>>, vector<16x1xf32>
    %4 = vector.broadcast %3 : vector<16x1xf32> to vector<16x128xf32>
    %5 = arith.addf %2, %4 : vector<16x128xf32>
    %cst_5 = arith.constant 0.000000e+00 : f32
    %6 = vector.broadcast %cst_5 : f32 to vector<16x128xf32>
    %7 = arith.maximumf %5, %6 : vector<16x128xf32>
    %cst_6 = arith.constant 0.000000e+00 : f32
    %8 = vector.broadcast %cst_6 : f32 to vector<16x128xf32>
    %9 = arith.cmpf oeq, %7, %8 : vector<16x128xf32>
    %10 = arith.extui %9 : vector<16x128xi1> to vector<16x128xi32>
    %11 = arith.trunci %10 : vector<16x128xi32> to vector<16x128xi8>
    %c0_7 = arith.constant 0 : index
    %c0_8 = arith.constant 0 : index
    %12 = vector.load %arg11[%c0_7, %c0_8] : memref<16x128xi8, #tpu.memory_space<vmem>>, vector<16x128xi8>
    tpu.vector_store %arg11[%c0_7, %c0_8], %11 {strides = array<i32>} : memref<16x128xi8, #tpu.memory_space<vmem>>, vector<16x128xi8>,
    %13 = vector.shape_cast %10 : vector<16x128xi32> to vector<1x16x128xi32>
    %cst_9 = arith.constant dense<0> : vector<1xi32>
    %14 = vector.multi_reduction <add>, %13, %cst_9 [1, 2] : vector<1x16x128xi32> to vector<1xi32>
    %15 = vector.shape_cast %14 : vector<1xi32> to vector<1x1x1xi32>
    %16 = vector.extract %15[0, 0, 0] : i32 from vector<1x1x1xi32>
    %c0_10 = arith.constant 0 : index
    %17 = memref.load %arg16[%c0_10] : memref<5xi32, #tpu.memory_space<smem>>
    memref.store %16, %arg16[%c0_10] : memref<5xi32, #tpu.memory_space<smem>>
    %cst_11 = arith.constant 5.000000e-01 : f32
    %18 = vector.broadcast %cst_11 : f32 to vector<16x128xf32>
    %19 = arith.mulf %18, %7 : vector<16x128xf32>
    %20 = math.tanh %19 : vector<16x128xf32>
    %21 = vector.shape_cast %20 : vector<16x128xf32> to vector<1x16x128xf32>
    %cst_12 = arith.constant dense<0.000000e+00> : vector<1xf32>
    %22 = vector.multi_reduction <add>, %21, %cst_12 [1, 2] : vector<1x16x128xf32> to vector<1xf32>
    %23 = vector.shape_cast %22 : vector<1xf32> to vector<1x1x1xf32>
    %24 = vector.extract %23[0, 0, 0] : f32 from vector<1x1x1xf32>
    %c0_13 = arith.constant 0 : index
    %25 = memref.load %arg17[%c0_13] : memref<5xf32, #tpu.memory_space<smem>>
    memref.store %24, %arg17[%c0_13] : memref<5xf32, #tpu.memory_space<smem>>
    %26 = vector.extract_strided_slice %7 {offsets = [0, 0], sizes = [16, 16], strides = [1, 1]} : vector<16x128xf32> to vector<16x16xf32>
    %27 = vector.extract_strided_slice %7 {offsets = [0, 16], sizes = [16, 16], strides = [1, 1]} : vector<16x128xf32> to vector<16x16xf32>
    %28 = arith.maximumf %26, %27 : vector<16x16xf32>
    %29 = vector.extract_strided_slice %7 {offsets = [0, 32], sizes = [16, 16], strides = [1, 1]} : vector<16x128xf32> to vector<16x16xf32>
    %30 = arith.maximumf %28, %29 : vector<16x16xf32>
    %31 = vector.extract_strided_slice %7 {offsets = [0, 48], sizes = [16, 16], strides = [1, 1]} : vector<16x128xf32> to vector<16x16xf32>
    %32 = arith.maximumf %30, %31 : vector<16x16xf32>
    %33 = vector.extract_strided_slice %32 {offsets = [0, 0], sizes = [1, 16], strides = [1, 1]} : vector<16x16xf32> to vector<1x16xf32>
    %c0_14 = arith.constant 0 : index
    %c0_15 = arith.constant 0 : index
    %34 = vector.load %arg18[%c0_14, %c0_15] : memref<2x256xf32, #tpu.memory_space<vmem>>, vector<1x16xf32>
    tpu.vector_store %arg18[%c0_14, %c0_15], %33 {strides = array<i32>} : memref<2x256xf32, #tpu.memory_space<vmem>>, vector<1x16xf32>,
    %35 = vector.extract_strided_slice %32 {offsets = [1, 0], sizes = [1, 16], strides = [1, 1]} : vector<16x16xf32> to vector<1x16xf32>
    %c0_16 = arith.constant 0 : index
    %c16 = arith.constant 16 : index
    %36 = vector.load %arg18[%c0_16, %c16] : memref<2x256xf32, #tpu.memory_space<vmem>>, vector<1x16xf32>
    tpu.vector_store %arg18[%c0_16, %c16], %35 {strides = array<i32>} : memref<2x256xf32, #tpu.memory_space<vmem>>, vector<1x16xf32>,
    %37 = vector.extract_strided_slice %32 {offsets = [2, 0], sizes = [1, 16], strides = [1, 1]} : vector<16x16xf32> to vector<1x16xf32>
    %c0_17 = arith.constant 0 : index
    %c32 = arith.constant 32 : index
    %38 = vector.load %arg18[%c0_17, %c32] : memref<2x256xf32, #tpu.memory_space<vmem>>, vector<1x16xf32>
    tpu.vector_store %arg18[%c0_17, %c32], %37 {strides = array<i32>} : memref<2x256xf32, #tpu.memory_space<vmem>>, vector<1x16xf32>,
    %39 = vector.extract_strided_slice %32 {offsets = [3, 0], sizes = [1, 16], strides = [1, 1]} : vector<16x16xf32> to vector<1x16xf32>
    %c0_18 = arith.constant 0 : index
    %c48 = arith.constant 48 : index
    %40 = vector.load %arg18[%c0_18, %c48] : memref<2x256xf32, #tpu.memory_space<vmem>>, vector<1x16xf32>
    tpu.vector_store %arg18[%c0_18, %c48], %39 {strides = array<i32>} : memref<2x256xf32, #tpu.memory_space<vmem>>, vector<1x16xf32>,
    %41 = vector.extract_strided_slice %32 {offsets = [4, 0], sizes = [1, 16], strides = [1, 1]} : vector<16x16xf32> to vector<1x16xf32>
    %c0_19 = arith.constant 0 : index
    %c64 = arith.constant 64 : index
    %42 = vector.load %arg18[%c0_19, %c64] : memref<2x256xf32, #tpu.memory_space<vmem>>, vector<1x16xf32>
    tpu.vector_store %arg18[%c0_19, %c64], %41 {strides = array<i32>} : memref<2x256xf32, #tpu.memory_space<vmem>>, vector<1x16xf32>,
    %43 = vector.extract_strided_slice %32 {offsets = [5, 0], sizes = [1, 16], strides = [1, 1]} : vector<16x16xf32> to vector<1x16xf32>
    %c0_20 = arith.constant 0 : index
    %c80 = arith.constant 80 : index
    %44 = vector.load %arg18[%c0_20, %c80] : memref<2x256xf32, #tpu.memory_space<vmem>>, vector<1x16xf32>
    tpu.vector_store %arg18[%c0_20, %c80], %43 {strides = array<i32>} : memref<2x256xf32, #tpu.memory_space<vmem>>, vector<1x16xf32>,
    %45 = vector.extract_strided_slice %32 {offsets = [6, 0], sizes = [1, 16], strides = [1, 1]} : vector<16x16xf32> to vector<1x16xf32>
    %c0_21 = arith.constant 0 : index
    %c96 = arith.constant 96 : index
    %46 = vector.load %arg18[%c0_21, %c96] : memref<2x256xf32, #tpu.memory_space<vmem>>, vector<1x16xf32>
    tpu.vector_store %arg18[%c0_21, %c96], %45 {strides = array<i32>} : memref<2x256xf32, #tpu.memory_space<vmem>>, vector<1x16xf32>,
    %47 = vector.extract_strided_slice %32 {offsets = [7, 0], sizes = [1, 16], strides = [1, 1]} : vector<16x16xf32> to vector<1x16xf32>
    %c0_22 = arith.constant 0 : index
    %c112 = arith.constant 112 : index
    %48 = vector.load %arg18[%c0_22, %c112] : memref<2x256xf32, #tpu.memory_space<vmem>>, vector<1x16xf32>
    tpu.vector_store %arg18[%c0_22, %c112], %47 {strides = array<i32>} : memref<2x256xf32, #tpu.memory_space<vmem>>, vector<1x16xf32>,
    %49 = vector.extract_strided_slice %32 {offsets = [8, 0], sizes = [1, 16], strides = [1, 1]} : vector<16x16xf32> to vector<1x16xf32>
    %c0_23 = arith.constant 0 : index
    %c128 = arith.constant 128 : index
    %50 = vector.load %arg18[%c0_23, %c128] : memref<2x256xf32, #tpu.memory_space<vmem>>, vector<1x16xf32>
    tpu.vector_store %arg18[%c0_23, %c128], %49 {strides = array<i32>} : memref<2x256xf32, #tpu.memory_space<vmem>>, vector<1x16xf32>,
    %51 = vector.extract_strided_slice %32 {offsets = [9, 0], sizes = [1, 16], strides = [1, 1]} : vector<16x16xf32> to vector<1x16xf32>
    %c0_24 = arith.constant 0 : index
    %c144 = arith.constant 144 : index
    %52 = vector.load %arg18[%c0_24, %c144] : memref<2x256xf32, #tpu.memory_space<vmem>>, vector<1x16xf32>
    tpu.vector_store %arg18[%c0_24, %c144], %51 {strides = array<i32>} : memref<2x256xf32, #tpu.memory_space<vmem>>, vector<1x16xf32>,
    %53 = vector.extract_strided_slice %32 {offsets = [10, 0], sizes = [1, 16], strides = [1, 1]} : vector<16x16xf32> to vector<1x16xf32>
    %c0_25 = arith.constant 0 : index
    %c160 = arith.constant 160 : index
    %54 = vector.load %arg18[%c0_25, %c160] : memref<2x256xf32, #tpu.memory_space<vmem>>, vector<1x16xf32>
    tpu.vector_store %arg18[%c0_25, %c160], %53 {strides = array<i32>} : memref<2x256xf32, #tpu.memory_space<vmem>>, vector<1x16xf32>,
    %55 = vector.extract_strided_slice %32 {offsets = [11, 0], sizes = [1, 16], strides = [1, 1]} : vector<16x16xf32> to vector<1x16xf32>
    %c0_26 = arith.constant 0 : index
    %c176 = arith.constant 176 : index
    %56 = vector.load %arg18[%c0_26, %c176] : memref<2x256xf32, #tpu.memory_space<vmem>>, vector<1x16xf32>
    tpu.vector_store %arg18[%c0_26, %c176], %55 {strides = array<i32>} : memref<2x256xf32, #tpu.memory_space<vmem>>, vector<1x16xf32>,
    %57 = vector.extract_strided_slice %32 {offsets = [12, 0], sizes = [1, 16], strides = [1, 1]} : vector<16x16xf32> to vector<1x16xf32>
    %c0_27 = arith.constant 0 : index
    %c192 = arith.constant 192 : index
    %58 = vector.load %arg18[%c0_27, %c192] : memref<2x256xf32, #tpu.memory_space<vmem>>, vector<1x16xf32>
    tpu.vector_store %arg18[%c0_27, %c192], %57 {strides = array<i32>} : memref<2x256xf32, #tpu.memory_space<vmem>>, vector<1x16xf32>,
    %59 = vector.extract_strided_slice %32 {offsets = [13, 0], sizes = [1, 16], strides = [1, 1]} : vector<16x16xf32> to vector<1x16xf32>
    %c0_28 = arith.constant 0 : index
    %c208 = arith.constant 208 : index
    %60 = vector.load %arg18[%c0_28, %c208] : memref<2x256xf32, #tpu.memory_space<vmem>>, vector<1x16xf32>
    tpu.vector_store %arg18[%c0_28, %c208], %59 {strides = array<i32>} : memref<2x256xf32, #tpu.memory_space<vmem>>, vector<1x16xf32>,
    %61 = vector.extract_strided_slice %32 {offsets = [14, 0], sizes = [1, 16], strides = [1, 1]} : vector<16x16xf32> to vector<1x16xf32>
    %c0_29 = arith.constant 0 : index
    %c224 = arith.constant 224 : index
    %62 = vector.load %arg18[%c0_29, %c224] : memref<2x256xf32, #tpu.memory_space<vmem>>, vector<1x16xf32>
    tpu.vector_store %arg18[%c0_29, %c224], %61 {strides = array<i32>} : memref<2x256xf32, #tpu.memory_space<vmem>>, vector<1x16xf32>,
    %63 = vector.extract_strided_slice %32 {offsets = [15, 0], sizes = [1, 16], strides = [1, 1]} : vector<16x16xf32> to vector<1x16xf32>
    %c0_30 = arith.constant 0 : index
    %c240 = arith.constant 240 : index
    %64 = vector.load %arg18[%c0_30, %c240] : memref<2x256xf32, #tpu.memory_space<vmem>>, vector<1x16xf32>
    tpu.vector_store %arg18[%c0_30, %c240], %63 {strides = array<i32>} : memref<2x256xf32, #tpu.memory_space<vmem>>, vector<1x16xf32>,
    %65 = vector.extract_strided_slice %7 {offsets = [0, 64], sizes = [16, 16], strides = [1, 1]} : vector<16x128xf32> to vector<16x16xf32>
    %66 = vector.extract_strided_slice %7 {offsets = [0, 80], sizes = [16, 16], strides = [1, 1]} : vector<16x128xf32> to vector<16x16xf32>
    %67 = arith.maximumf %65, %66 : vector<16x16xf32>
    %68 = vector.extract_strided_slice %7 {offsets = [0, 96], sizes = [16, 16], strides = [1, 1]} : vector<16x128xf32> to vector<16x16xf32>
    %69 = arith.maximumf %67, %68 : vector<16x16xf32>
    %70 = vector.extract_strided_slice %7 {offsets = [0, 112], sizes = [16, 16], strides = [1, 1]} : vector<16x128xf32> to vector<16x16xf32>
    %71 = arith.maximumf %69, %70 : vector<16x16xf32>
    %72 = vector.extract_strided_slice %71 {offsets = [0, 0], sizes = [1, 16], strides = [1, 1]} : vector<16x16xf32> to vector<1x16xf32>
    %c1 = arith.constant 1 : index
    %c0_31 = arith.constant 0 : index
    %73 = vector.load %arg18[%c1, %c0_31] : memref<2x256xf32, #tpu.memory_space<vmem>>, vector<1x16xf32>
    tpu.vector_store %arg18[%c1, %c0_31], %72 {strides = array<i32>} : memref<2x256xf32, #tpu.memory_space<vmem>>, vector<1x16xf32>,
    %74 = vector.extract_strided_slice %71 {offsets = [1, 0], sizes = [1, 16], strides = [1, 1]} : vector<16x16xf32> to vector<1x16xf32>
    %c1_32 = arith.constant 1 : index
    %c16_33 = arith.constant 16 : index
    %75 = vector.load %arg18[%c1_32, %c16_33] : memref<2x256xf32, #tpu.memory_space<vmem>>, vector<1x16xf32>
    tpu.vector_store %arg18[%c1_32, %c16_33], %74 {strides = array<i32>} : memref<2x256xf32, #tpu.memory_space<vmem>>, vector<1x16xf32>,
    %76 = vector.extract_strided_slice %71 {offsets = [2, 0], sizes = [1, 16], strides = [1, 1]} : vector<16x16xf32> to vector<1x16xf32>
    %c1_34 = arith.constant 1 : index
    %c32_35 = arith.constant 32 : index
    %77 = vector.load %arg18[%c1_34, %c32_35] : memref<2x256xf32, #tpu.memory_space<vmem>>, vector<1x16xf32>
    tpu.vector_store %arg18[%c1_34, %c32_35], %76 {strides = array<i32>} : memref<2x256xf32, #tpu.memory_space<vmem>>, vector<1x16xf32>,
    %78 = vector.extract_strided_slice %71 {offsets = [3, 0], sizes = [1, 16], strides = [1, 1]} : vector<16x16xf32> to vector<1x16xf32>
    %c1_36 = arith.constant 1 : index
    %c48_37 = arith.constant 48 : index
    %79 = vector.load %arg18[%c1_36, %c48_37] : memref<2x256xf32, #tpu.memory_space<vmem>>, vector<1x16xf32>
    tpu.vector_store %arg18[%c1_36, %c48_37], %78 {strides = array<i32>} : memref<2x256xf32, #tpu.memory_space<vmem>>, vector<1x16xf32>,
    %80 = vector.extract_strided_slice %71 {offsets = [4, 0], sizes = [1, 16], strides = [1, 1]} : vector<16x16xf32> to vector<1x16xf32>
    %c1_38 = arith.constant 1 : index
    %c64_39 = arith.constant 64 : index
    %81 = vector.load %arg18[%c1_38, %c64_39] : memref<2x256xf32, #tpu.memory_space<vmem>>, vector<1x16xf32>
    tpu.vector_store %arg18[%c1_38, %c64_39], %80 {strides = array<i32>} : memref<2x256xf32, #tpu.memory_space<vmem>>, vector<1x16xf32>,
    %82 = vector.extract_strided_slice %71 {offsets = [5, 0], sizes = [1, 16], strides = [1, 1]} : vector<16x16xf32> to vector<1x16xf32>
    %c1_40 = arith.constant 1 : index
    %c80_41 = arith.constant 80 : index
    %83 = vector.load %arg18[%c1_40, %c80_41] : memref<2x256xf32, #tpu.memory_space<vmem>>, vector<1x16xf32>
    tpu.vector_store %arg18[%c1_40, %c80_41], %82 {strides = array<i32>} : memref<2x256xf32, #tpu.memory_space<vmem>>, vector<1x16xf32>,
    %84 = vector.extract_strided_slice %71 {offsets = [6, 0], sizes = [1, 16], strides = [1, 1]} : vector<16x16xf32> to vector<1x16xf32>
    %c1_42 = arith.constant 1 : index
    %c96_43 = arith.constant 96 : index
    %85 = vector.load %arg18[%c1_42, %c96_43] : memref<2x256xf32, #tpu.memory_space<vmem>>, vector<1x16xf32>
    tpu.vector_store %arg18[%c1_42, %c96_43], %84 {strides = array<i32>} : memref<2x256xf32, #tpu.memory_space<vmem>>, vector<1x16xf32>,
    %86 = vector.extract_strided_slice %71 {offsets = [7, 0], sizes = [1, 16], strides = [1, 1]} : vector<16x16xf32> to vector<1x16xf32>
    %c1_44 = arith.constant 1 : index
    %c112_45 = arith.constant 112 : index
    %87 = vector.load %arg18[%c1_44, %c112_45] : memref<2x256xf32, #tpu.memory_space<vmem>>, vector<1x16xf32>
    tpu.vector_store %arg18[%c1_44, %c112_45], %86 {strides = array<i32>} : memref<2x256xf32, #tpu.memory_space<vmem>>, vector<1x16xf32>,
    %88 = vector.extract_strided_slice %71 {offsets = [8, 0], sizes = [1, 16], strides = [1, 1]} : vector<16x16xf32> to vector<1x16xf32>
    %c1_46 = arith.constant 1 : index
    %c128_47 = arith.constant 128 : index
    %89 = vector.load %arg18[%c1_46, %c128_47] : memref<2x256xf32, #tpu.memory_space<vmem>>, vector<1x16xf32>
    tpu.vector_store %arg18[%c1_46, %c128_47], %88 {strides = array<i32>} : memref<2x256xf32, #tpu.memory_space<vmem>>, vector<1x16xf32>,
    %90 = vector.extract_strided_slice %71 {offsets = [9, 0], sizes = [1, 16], strides = [1, 1]} : vector<16x16xf32> to vector<1x16xf32>
    %c1_48 = arith.constant 1 : index
    %c144_49 = arith.constant 144 : index
    %91 = vector.load %arg18[%c1_48, %c144_49] : memref<2x256xf32, #tpu.memory_space<vmem>>, vector<1x16xf32>
    tpu.vector_store %arg18[%c1_48, %c144_49], %90 {strides = array<i32>} : memref<2x256xf32, #tpu.memory_space<vmem>>, vector<1x16xf32>,
    %92 = vector.extract_strided_slice %71 {offsets = [10, 0], sizes = [1, 16], strides = [1, 1]} : vector<16x16xf32> to vector<1x16xf32>
    %c1_50 = arith.constant 1 : index
    %c160_51 = arith.constant 160 : index
    %93 = vector.load %arg18[%c1_50, %c160_51] : memref<2x256xf32, #tpu.memory_space<vmem>>, vector<1x16xf32>
    tpu.vector_store %arg18[%c1_50, %c160_51], %92 {strides = array<i32>} : memref<2x256xf32, #tpu.memory_space<vmem>>, vector<1x16xf32>,
    %94 = vector.extract_strided_slice %71 {offsets = [11, 0], sizes = [1, 16], strides = [1, 1]} : vector<16x16xf32> to vector<1x16xf32>
    %c1_52 = arith.constant 1 : index
    %c176_53 = arith.constant 176 : index
    %95 = vector.load %arg18[%c1_52, %c176_53] : memref<2x256xf32, #tpu.memory_space<vmem>>, vector<1x16xf32>
    tpu.vector_store %arg18[%c1_52, %c176_53], %94 {strides = array<i32>} : memref<2x256xf32, #tpu.memory_space<vmem>>, vector<1x16xf32>,
    %96 = vector.extract_strided_slice %71 {offsets = [12, 0], sizes = [1, 16], strides = [1, 1]} : vector<16x16xf32> to vector<1x16xf32>
    %c1_54 = arith.constant 1 : index
    %c192_55 = arith.constant 192 : index
    %97 = vector.load %arg18[%c1_54, %c192_55] : memref<2x256xf32, #tpu.memory_space<vmem>>, vector<1x16xf32>
    tpu.vector_store %arg18[%c1_54, %c192_55], %96 {strides = array<i32>} : memref<2x256xf32, #tpu.memory_space<vmem>>, vector<1x16xf32>,
    %98 = vector.extract_strided_slice %71 {offsets = [13, 0], sizes = [1, 16], strides = [1, 1]} : vector<16x16xf32> to vector<1x16xf32>
    %c1_56 = arith.constant 1 : index
    %c208_57 = arith.constant 208 : index
    %99 = vector.load %arg18[%c1_56, %c208_57] : memref<2x256xf32, #tpu.memory_space<vmem>>, vector<1x16xf32>
    tpu.vector_store %arg18[%c1_56, %c208_57], %98 {strides = array<i32>} : memref<2x256xf32, #tpu.memory_space<vmem>>, vector<1x16xf32>,
    %100 = vector.extract_strided_slice %71 {offsets = [14, 0], sizes = [1, 16], strides = [1, 1]} : vector<16x16xf32> to vector<1x16xf32>
    %c1_58 = arith.constant 1 : index
    %c224_59 = arith.constant 224 : index
    %101 = vector.load %arg18[%c1_58, %c224_59] : memref<2x256xf32, #tpu.memory_space<vmem>>, vector<1x16xf32>
    tpu.vector_store %arg18[%c1_58, %c224_59], %100 {strides = array<i32>} : memref<2x256xf32, #tpu.memory_space<vmem>>, vector<1x16xf32>,
    %102 = vector.extract_strided_slice %71 {offsets = [15, 0], sizes = [1, 16], strides = [1, 1]} : vector<16x16xf32> to vector<1x16xf32>
    %c1_60 = arith.constant 1 : index
    %c240_61 = arith.constant 240 : index
    %103 = vector.load %arg18[%c1_60, %c240_61] : memref<2x256xf32, #tpu.memory_space<vmem>>, vector<1x16xf32>
    tpu.vector_store %arg18[%c1_60, %c240_61], %102 {strides = array<i32>} : memref<2x256xf32, #tpu.memory_space<vmem>>, vector<1x16xf32>,
    %c0_62 = arith.constant 0 : index
    %c0_63 = arith.constant 0 : index
    %104 = vector.load %arg18[%c0_62, %c0_63] : memref<2x256xf32, #tpu.memory_space<vmem>>, vector<2x256xf32>
    %cst_64 = arith.constant 0.000000e+00 : f32
    %105 = vector.broadcast %cst_64 : f32 to vector<2x256xf32>
    %106 = arith.cmpf oeq, %104, %105 : vector<2x256xf32>
    %107 = arith.extui %106 : vector<2x256xi1> to vector<2x256xi32>
    %108 = arith.trunci %107 : vector<2x256xi32> to vector<2x256xi8>
    %c0_65 = arith.constant 0 : index
    %c0_66 = arith.constant 0 : index
    %109 = vector.load %arg12[%c0_65, %c0_66] : memref<2x256xi8, #tpu.memory_space<vmem>>, vector<2x256xi8>
    tpu.vector_store %arg12[%c0_65, %c0_66], %108 {strides = array<i32>} : memref<2x256xi8, #tpu.memory_space<vmem>>, vector<2x256xi8>,
    %110 = vector.shape_cast %107 : vector<2x256xi32> to vector<1x2x256xi32>
    %cst_67 = arith.constant dense<0> : vector<1xi32>
    %111 = vector.multi_reduction <add>, %110, %cst_67 [1, 2] : vector<1x2x256xi32> to vector<1xi32>
    %112 = vector.shape_cast %111 : vector<1xi32> to vector<1x1x1xi32>
    %113 = vector.extract %112[0, 0, 0] : i32 from vector<1x1x1xi32>
    %c1_68 = arith.constant 1 : index
    %114 = memref.load %arg16[%c1_68] : memref<5xi32, #tpu.memory_space<smem>>
    memref.store %113, %arg16[%c1_68] : memref<5xi32, #tpu.memory_space<smem>>
    %cst_69 = arith.constant 5.000000e-01 : f32
    %115 = vector.broadcast %cst_69 : f32 to vector<2x256xf32>
    %116 = arith.mulf %115, %104 : vector<2x256xf32>
    %117 = math.tanh %116 : vector<2x256xf32>
    %118 = vector.shape_cast %117 : vector<2x256xf32> to vector<1x2x256xf32>
    %cst_70 = arith.constant dense<0.000000e+00> : vector<1xf32>
    %119 = vector.multi_reduction <add>, %118, %cst_70 [1, 2] : vector<1x2x256xf32> to vector<1xf32>
    %120 = vector.shape_cast %119 : vector<1xf32> to vector<1x1x1xf32>
    %121 = vector.extract %120[0, 0, 0] : f32 from vector<1x1x1xf32>
    %c1_71 = arith.constant 1 : index
    %122 = memref.load %arg17[%c1_71] : memref<5xf32, #tpu.memory_space<smem>>
    memref.store %121, %arg17[%c1_71] : memref<5xf32, #tpu.memory_space<smem>>
    %c0_72 = arith.constant 0 : index
    %c0_73 = arith.constant 0 : index
    %123 = vector.load %arg4[%c0_72, %c0_73] : memref<120x256xf32, #tpu.memory_space<vmem>>, vector<120x256xf32>
    %cst_74 = arith.constant dense<0.000000e+00> : vector<2x120xf32>
    %124 = tpu.matmul %104, %123, %cst_74 {dimension_numbers = #tpu.dot_dimension_numbers<[1], [1], [0], [0], [0, 0, 1, 0], [], []>} : vector<2x256xf32>, vector<120x256xf32>, vector<2x120xf32> -> vector<2x120xf32>
    %c0_75 = arith.constant 0 : index
    %c0_76 = arith.constant 0 : index
    %125 = vector.load %arg5[%c0_75, %c0_76] : memref<1x120xf32, #tpu.memory_space<vmem>>, vector<1x120xf32>
    %126 = vector.broadcast %125 : vector<1x120xf32> to vector<2x120xf32>
    %127 = arith.addf %124, %126 : vector<2x120xf32>
    %cst_77 = arith.constant 0.000000e+00 : f32
    %128 = vector.broadcast %cst_77 : f32 to vector<2x120xf32>
    %129 = arith.maximumf %127, %128 : vector<2x120xf32>
    %cst_78 = arith.constant 0.000000e+00 : f32
    %130 = vector.broadcast %cst_78 : f32 to vector<2x120xf32>
    %131 = arith.cmpf oeq, %129, %130 : vector<2x120xf32>
    %132 = arith.extui %131 : vector<2x120xi1> to vector<2x120xi32>
    %133 = arith.trunci %132 : vector<2x120xi32> to vector<2x120xi8>
    %c0_79 = arith.constant 0 : index
    %c0_80 = arith.constant 0 : index
    %134 = vector.load %arg13[%c0_79, %c0_80] : memref<2x120xi8, #tpu.memory_space<vmem>>, vector<2x120xi8>
    tpu.vector_store %arg13[%c0_79, %c0_80], %133 {strides = array<i32>} : memref<2x120xi8, #tpu.memory_space<vmem>>, vector<2x120xi8>,
    %135 = vector.shape_cast %132 : vector<2x120xi32> to vector<1x2x120xi32>
    %cst_81 = arith.constant dense<0> : vector<1xi32>
    %136 = vector.multi_reduction <add>, %135, %cst_81 [1, 2] : vector<1x2x120xi32> to vector<1xi32>
    %137 = vector.shape_cast %136 : vector<1xi32> to vector<1x1x1xi32>
    %138 = vector.extract %137[0, 0, 0] : i32 from vector<1x1x1xi32>
    %c2 = arith.constant 2 : index
    %139 = memref.load %arg16[%c2] : memref<5xi32, #tpu.memory_space<smem>>
    memref.store %138, %arg16[%c2] : memref<5xi32, #tpu.memory_space<smem>>
    %cst_82 = arith.constant 5.000000e-01 : f32
    %140 = vector.broadcast %cst_82 : f32 to vector<2x120xf32>
    %141 = arith.mulf %140, %129 : vector<2x120xf32>
    %142 = math.tanh %141 : vector<2x120xf32>
    %143 = vector.shape_cast %142 : vector<2x120xf32> to vector<1x2x120xf32>
    %cst_83 = arith.constant dense<0.000000e+00> : vector<1xf32>
    %144 = vector.multi_reduction <add>, %143, %cst_83 [1, 2] : vector<1x2x120xf32> to vector<1xf32>
    %145 = vector.shape_cast %144 : vector<1xf32> to vector<1x1x1xf32>
    %146 = vector.extract %145[0, 0, 0] : f32 from vector<1x1x1xf32>
    %c2_84 = arith.constant 2 : index
    %147 = memref.load %arg17[%c2_84] : memref<5xf32, #tpu.memory_space<smem>>
    memref.store %146, %arg17[%c2_84] : memref<5xf32, #tpu.memory_space<smem>>
    %c0_85 = arith.constant 0 : index
    %c0_86 = arith.constant 0 : index
    %148 = vector.load %arg6[%c0_85, %c0_86] : memref<84x120xf32, #tpu.memory_space<vmem>>, vector<84x120xf32>
    %cst_87 = arith.constant dense<0.000000e+00> : vector<2x84xf32>
    %149 = tpu.matmul %129, %148, %cst_87 {dimension_numbers = #tpu.dot_dimension_numbers<[1], [1], [0], [0], [0, 0, 1, 0], [], []>} : vector<2x120xf32>, vector<84x120xf32>, vector<2x84xf32> -> vector<2x84xf32>
    %c0_88 = arith.constant 0 : index
    %c0_89 = arith.constant 0 : index
    %150 = vector.load %arg7[%c0_88, %c0_89] : memref<1x84xf32, #tpu.memory_space<vmem>>, vector<1x84xf32>
    %151 = vector.broadcast %150 : vector<1x84xf32> to vector<2x84xf32>
    %152 = arith.addf %149, %151 : vector<2x84xf32>
    %cst_90 = arith.constant 0.000000e+00 : f32
    %153 = vector.broadcast %cst_90 : f32 to vector<2x84xf32>
    %154 = arith.maximumf %152, %153 : vector<2x84xf32>
    %cst_91 = arith.constant 0.000000e+00 : f32
    %155 = vector.broadcast %cst_91 : f32 to vector<2x84xf32>
    %156 = arith.cmpf oeq, %154, %155 : vector<2x84xf32>
    %157 = arith.extui %156 : vector<2x84xi1> to vector<2x84xi32>
    %158 = arith.trunci %157 : vector<2x84xi32> to vector<2x84xi8>
    %c0_92 = arith.constant 0 : index
    %c0_93 = arith.constant 0 : index
    %159 = vector.load %arg14[%c0_92, %c0_93] : memref<2x84xi8, #tpu.memory_space<vmem>>, vector<2x84xi8>
    tpu.vector_store %arg14[%c0_92, %c0_93], %158 {strides = array<i32>} : memref<2x84xi8, #tpu.memory_space<vmem>>, vector<2x84xi8>,
    %160 = vector.shape_cast %157 : vector<2x84xi32> to vector<1x2x84xi32>
    %cst_94 = arith.constant dense<0> : vector<1xi32>
    %161 = vector.multi_reduction <add>, %160, %cst_94 [1, 2] : vector<1x2x84xi32> to vector<1xi32>
    %162 = vector.shape_cast %161 : vector<1xi32> to vector<1x1x1xi32>
    %163 = vector.extract %162[0, 0, 0] : i32 from vector<1x1x1xi32>
    %c3 = arith.constant 3 : index
    %164 = memref.load %arg16[%c3] : memref<5xi32, #tpu.memory_space<smem>>
    memref.store %163, %arg16[%c3] : memref<5xi32, #tpu.memory_space<smem>>
    %cst_95 = arith.constant 5.000000e-01 : f32
    %165 = vector.broadcast %cst_95 : f32 to vector<2x84xf32>
    %166 = arith.mulf %165, %154 : vector<2x84xf32>
    %167 = math.tanh %166 : vector<2x84xf32>
    %168 = vector.shape_cast %167 : vector<2x84xf32> to vector<1x2x84xf32>
    %cst_96 = arith.constant dense<0.000000e+00> : vector<1xf32>
    %169 = vector.multi_reduction <add>, %168, %cst_96 [1, 2] : vector<1x2x84xf32> to vector<1xf32>
    %170 = vector.shape_cast %169 : vector<1xf32> to vector<1x1x1xf32>
    %171 = vector.extract %170[0, 0, 0] : f32 from vector<1x1x1xf32>
    %c3_97 = arith.constant 3 : index
    %172 = memref.load %arg17[%c3_97] : memref<5xf32, #tpu.memory_space<smem>>
    memref.store %171, %arg17[%c3_97] : memref<5xf32, #tpu.memory_space<smem>>
    %c0_98 = arith.constant 0 : index
    %c0_99 = arith.constant 0 : index
    %173 = vector.load %arg8[%c0_98, %c0_99] : memref<10x84xf32, #tpu.memory_space<vmem>>, vector<10x84xf32>
    %cst_100 = arith.constant dense<0.000000e+00> : vector<2x10xf32>
    %174 = tpu.matmul %154, %173, %cst_100 {dimension_numbers = #tpu.dot_dimension_numbers<[1], [1], [0], [0], [0, 0, 1, 0], [], []>} : vector<2x84xf32>, vector<10x84xf32>, vector<2x10xf32> -> vector<2x10xf32>
    %c0_101 = arith.constant 0 : index
    %c0_102 = arith.constant 0 : index
    %175 = vector.load %arg9[%c0_101, %c0_102] : memref<1x10xf32, #tpu.memory_space<vmem>>, vector<1x10xf32>
    %176 = vector.broadcast %175 : vector<1x10xf32> to vector<2x10xf32>
    %177 = arith.addf %174, %176 : vector<2x10xf32>
    %cst_103 = arith.constant 0.000000e+00 : f32
    %178 = vector.broadcast %cst_103 : f32 to vector<2x10xf32>
    %179 = arith.maximumf %177, %178 : vector<2x10xf32>
    %cst_104 = arith.constant 0.000000e+00 : f32
    %180 = vector.broadcast %cst_104 : f32 to vector<2x10xf32>
    %181 = arith.cmpf oeq, %179, %180 : vector<2x10xf32>
    %182 = arith.extui %181 : vector<2x10xi1> to vector<2x10xi32>
    %183 = arith.trunci %182 : vector<2x10xi32> to vector<2x10xi8>
    %c0_105 = arith.constant 0 : index
    %c0_106 = arith.constant 0 : index
    %184 = vector.load %arg15[%c0_105, %c0_106] : memref<2x10xi8, #tpu.memory_space<vmem>>, vector<2x10xi8>
    tpu.vector_store %arg15[%c0_105, %c0_106], %183 {strides = array<i32>} : memref<2x10xi8, #tpu.memory_space<vmem>>, vector<2x10xi8>,
    %185 = vector.shape_cast %182 : vector<2x10xi32> to vector<1x2x10xi32>
    %cst_107 = arith.constant dense<0> : vector<1xi32>
    %186 = vector.multi_reduction <add>, %185, %cst_107 [1, 2] : vector<1x2x10xi32> to vector<1xi32>
    %187 = vector.shape_cast %186 : vector<1xi32> to vector<1x1x1xi32>
    %188 = vector.extract %187[0, 0, 0] : i32 from vector<1x1x1xi32>
    %c4 = arith.constant 4 : index
    %189 = memref.load %arg16[%c4] : memref<5xi32, #tpu.memory_space<smem>>
    memref.store %188, %arg16[%c4] : memref<5xi32, #tpu.memory_space<smem>>
    %cst_108 = arith.constant 5.000000e-01 : f32
    %190 = vector.broadcast %cst_108 : f32 to vector<2x10xf32>
    %191 = arith.mulf %190, %179 : vector<2x10xf32>
    %192 = math.tanh %191 : vector<2x10xf32>
    %193 = vector.shape_cast %192 : vector<2x10xf32> to vector<1x2x10xf32>
    %cst_109 = arith.constant dense<0.000000e+00> : vector<1xf32>
    %194 = vector.multi_reduction <add>, %193, %cst_109 [1, 2] : vector<1x2x10xf32> to vector<1xf32>
    %195 = vector.shape_cast %194 : vector<1xf32> to vector<1x1x1xf32>
    %196 = vector.extract %195[0, 0, 0] : f32 from vector<1x1x1xf32>
    %c4_110 = arith.constant 4 : index
    %197 = memref.load %arg17[%c4_110] : memref<5xf32, #tpu.memory_space<smem>>
    memref.store %196, %arg17[%c4_110] : memref<5xf32, #tpu.memory_space<smem>>
    %c0_111 = arith.constant 0 : index
    %c0_112 = arith.constant 0 : index
    %198 = vector.load %arg10[%c0_111, %c0_112] : memref<2x10xf32, #tpu.memory_space<vmem>>, vector<2x10xf32>
    tpu.vector_store %arg10[%c0_111, %c0_112], %179 {strides = array<i32>} : memref<2x10xf32, #tpu.memory_space<vmem>>, vector<2x10xf32>,
    return
  }
  func.func @transform_0(%arg0: i32) -> (i32, i32) {
    %c0_i32 = arith.constant 0 : i32
    %c0_i32_0 = arith.constant 0 : i32
    %c0_i32_1 = arith.constant 0 : i32
    return %c0_i32, %c0_i32_0 : i32, i32
  }
  func.func @transform_1(%arg0: i32) -> (i32, i32) {
    %c0_i32 = arith.constant 0 : i32
    %c0_i32_0 = arith.constant 0 : i32
    %c0_i32_1 = arith.constant 0 : i32
    return %c0_i32, %c0_i32_0 : i32, i32
  }
  func.func @transform_2(%arg0: i32) -> (i32, i32) {
    %c0_i32 = arith.constant 0 : i32
    %c0_i32_0 = arith.constant 0 : i32
    %c0_i32_1 = arith.constant 0 : i32
    return %c0_i32, %c0_i32_0 : i32, i32
  }
  func.func @transform_3(%arg0: i32) -> (i32, i32) {
    %c0_i32 = arith.constant 0 : i32
    %c0_i32_0 = arith.constant 0 : i32
    %c0_i32_1 = arith.constant 0 : i32
    return %c0_i32, %c0_i32_0 : i32, i32
  }
  func.func @transform_4(%arg0: i32) -> (i32, i32) {
    %c0_i32 = arith.constant 0 : i32
    %c0_i32_0 = arith.constant 0 : i32
    %c0_i32_1 = arith.constant 0 : i32
    return %c0_i32, %c0_i32_0 : i32, i32
  }
  func.func @transform_5(%arg0: i32) -> (i32, i32) {
    %c0_i32 = arith.constant 0 : i32
    %c0_i32_0 = arith.constant 0 : i32
    %c0_i32_1 = arith.constant 0 : i32
    return %c0_i32, %c0_i32_0 : i32, i32
  }
  func.func @transform_6(%arg0: i32) -> (i32, i32) {
    %c0_i32 = arith.constant 0 : i32
    %c0_i32_0 = arith.constant 0 : i32
    %c0_i32_1 = arith.constant 0 : i32
    return %c0_i32, %c0_i32_0 : i32, i32
  }
  func.func @transform_7(%arg0: i32) -> (i32, i32) {
    %c0_i32 = arith.constant 0 : i32
    %c0_i32_0 = arith.constant 0 : i32
    %c0_i32_1 = arith.constant 0 : i32
    return %c0_i32, %c0_i32_0 : i32, i32
  }
  func.func @transform_8(%arg0: i32) -> (i32, i32) {
    %c0_i32 = arith.constant 0 : i32
    %c0_i32_0 = arith.constant 0 : i32
    %c0_i32_1 = arith.constant 0 : i32
    return %c0_i32, %c0_i32_0 : i32, i32
  }
  func.func @transform_9(%arg0: i32) -> (i32, i32) {
    %c0_i32 = arith.constant 0 : i32
    %c0_i32_0 = arith.constant 0 : i32
    %c0_i32_1 = arith.constant 0 : i32
    return %c0_i32, %c0_i32_0 : i32, i32
  }
  func.func @transform_10(%arg0: i32) -> (i32, i32) {
    %c0_i32 = arith.constant 0 : i32
    %c0_i32_0 = arith.constant 0 : i32
    %c0_i32_1 = arith.constant 0 : i32
    return %c0_i32, %c0_i32_0 : i32, i32
  }
  func.func @transform_11(%arg0: i32) -> (i32, i32) {
    %c0_i32 = arith.constant 0 : i32
    %c0_i32_0 = arith.constant 0 : i32
    %c0_i32_1 = arith.constant 0 : i32
    return %c0_i32, %c0_i32_0 : i32, i32
  }
  func.func @transform_12(%arg0: i32) -> (i32, i32) {
    %c0_i32 = arith.constant 0 : i32
    %c0_i32_0 = arith.constant 0 : i32
    %c0_i32_1 = arith.constant 0 : i32
    return %c0_i32, %c0_i32_0 : i32, i32
  }
  func.func @transform_13(%arg0: i32) -> (i32, i32) {
    %c0_i32 = arith.constant 0 : i32
    %c0_i32_0 = arith.constant 0 : i32
    %c0_i32_1 = arith.constant 0 : i32
    return %c0_i32, %c0_i32_0 : i32, i32
  }
  func.func @transform_14(%arg0: i32) -> (i32, i32) {
    %c0_i32 = arith.constant 0 : i32
    %c0_i32_0 = arith.constant 0 : i32
    %c0_i32_1 = arith.constant 0 : i32
    return %c0_i32, %c0_i32_0 : i32, i32
  }
  func.func @transform_15(%arg0: i32) -> i32 {
    %c0_i32 = arith.constant 0 : i32
    %c0_i32_0 = arith.constant 0 : i32
    return %c0_i32 : i32
  }
  func.func @transform_16(%arg0: i32) -> i32 {
    %c0_i32 = arith.constant 0 : i32
    %c0_i32_0 = arith.constant 0 : i32
    return %c0_i32 : i32
  }
}

</mosaic_0001>

<llo_original>
// kernel: lenet5_forward.2
$region0: #{lenet5_forward.2}
  #allocation0 [shape = 'u32[]', space=smem, size = 0x4, offset = 0x4, fixed_abs, tag = 'smem constant byte address 0x4 - core index']
  #allocation1 [shape = 'u32[144,128]{1,0:T(1,128)}', space=vmem, size = 0x12000, scoped, tag = 'internal scratch']
  %s0 = inlined_call_operand.vmem [shape: f32[25,1152], index: 0, kind: input, shape index: {}]
  %s1 = inlined_call_operand.vmem [shape: f32[6,25], index: 1, kind: input, shape index: {}]
  %s2 = inlined_call_operand.vmem [shape: f32[6,1], index: 2, kind: input, shape index: {}]
  %s3 = inlined_call_operand.vmem [shape: f32[6,288], index: 3, kind: output, shape index: {0}]
  %s4 = inlined_call_operand.vmem [shape: u8[6,1152], index: 4, kind: output, shape index: {1}]
  %s5 = inlined_call_operand.vmem [shape: u8[6,288], index: 5, kind: output, shape index: {2}]
  %s6 = inlined_call_operand.vmem [shape: s32[2], index: 6, kind: output, shape index: {3}]
  %s7 = inlined_call_operand.vmem [shape: f32[2], index: 7, kind: output, shape index: {4}]
  %8 = xla_tuple %s3, %s4, %s5, %s6, %s7
  %s9 = sld [smem:[#allocation0]]
  $region54: #{lenet5_forward.2} parent=0
    _
  %s11 = ssub.s32 1, %s9
  %s12 = scalar_select 0, %s11, %s9
  $region1: #{lenet5_forward.2} parent=0
    #allocation2 [shape = 'u8[512]{0}', space=smem, size = 0x200, scoped, tag = 'output window, operand 3, single buffered']
    #allocation3 [shape = 's32[1]{0}', space=sflag, size = 0x4, scoped, tag = 'scoped memory for lenet5_forward.2']
    #allocation4 [shape = 'u8[512]{0}', space=smem, size = 0x200, scoped, tag = 'output window, operand 4, single buffered']
    #allocation5 [shape = 's32[1]{0}', space=sflag, size = 0x4, scoped, tag = 'scoped memory for lenet5_forward.2']
    %13 = vsyncpa [#allocation3], 0
    %14 = vsyncpa [#allocation5], 0
    // Predicated region
    $region2: #{lenet5_forward.2} parent=1 // pred_check
      _
    $region3: #{lenet5_forward.2} parent=1 // pred_check_branch
      %16 = sbr.rel (0) target = $region5
    $region4: #{lenet5_forward.2} parent=1 // pred_region
      _
    $region5: #{lenet5_forward.2} parent=1 // pred_fallthru
      _
    // Predicated region
    $region6: #{lenet5_forward.2} parent=1 // pred_check
      _
    $region7: #{lenet5_forward.2} parent=1 // pred_check_branch
      %18 = sbr.rel (0) target = $region9
    $region8: #{lenet5_forward.2} parent=1 // pred_region
      _
    $region9: #{lenet5_forward.2} parent=1 // pred_fallthru
      _
    // Predicated region
    $region10: #{lenet5_forward.2} parent=1 // pred_check
      _
    $region11: #{lenet5_forward.2} parent=1 // pred_check_branch
      %20 = sbr.rel (0) target = $region13
    $region12: #{lenet5_forward.2} parent=1 // pred_region
      _
    $region13: #{lenet5_forward.2} parent=1 // pred_fallthru
      _
    %v23 = vld [vmem:[%s1] sm:$0x3f]
    %v24 = vld [vmem:[%s0] sm:$0xff]
    %v25 = vld [vmem:[%s0 + $0x8] sm:$0xff]
    %v26 = vld [vmem:[%s0 + $0x10] sm:$0xff]
    %v27 = vld [vmem:[%s0 + $0x18] sm:$0xff]
    %v28 = vld [vmem:[%s0 + $0x20] sm:$0xff]
    %v29 = vld [vmem:[%s0 + $0x28] sm:$0xff]
    %v30 = vld [vmem:[%s0 + $0x30] sm:$0xff]
    %v31 = vld [vmem:[%s0 + $0x38] sm:$0xff]
    %v32 = vld [vmem:[%s0 + $0x40] sm:$0xff]
    %v33 = vld [vmem:[%s0 + $0x48] sm:$0xff]
    %v34 = vld [vmem:[%s0 + $0x50] sm:$0xff]
    %v35 = vld [vmem:[%s0 + $0x58] sm:$0xff]
    %v36 = vld [vmem:[%s0 + $0x60] sm:$0xff]
    %v37 = vld [vmem:[%s0 + $0x68] sm:$0xff]
    %v38 = vld [vmem:[%s0 + $0x70] sm:$0xff]
    %v39 = vld [vmem:[%s0 + $0x78] sm:$0xff]
    %v40 = vld [vmem:[%s0 + $0x80] sm:$0xff]
    %v41 = vld [vmem:[%s0 + $0x88] sm:$0xff]
    %v42 = vld [vmem:[%s0 + $0x90] sm:$0xff]
    %v43 = vld [vmem:[%s0 + $0x98] sm:$0xff]
    %v44 = vld [vmem:[%s0 + $0xa0] sm:$0xff]
    %v45 = vld [vmem:[%s0 + $0xa8] sm:$0xff]
    %v46 = vld [vmem:[%s0 + $0xb0] sm:$0xff]
    %v47 = vld [vmem:[%s0 + $0xb8] sm:$0xff]
    %v48 = vld [vmem:[%s0 + $0xc0] sm:$0xff]
    %v49 = vld [vmem:[%s0 + $0xc8] sm:$0xff]
    %v50 = vld [vmem:[%s0 + $0xd0] sm:$0xff]
    %v51 = vld [vmem:[%s0 + $0xd8] sm:$0x1]
    %v52 = vld [vmem:[%s0 + $0xe0] sm:$0x1]
    %v53 = vld [vmem:[%s0 + $0xe8] sm:$0x1]
    %v54 = vld [vmem:[%s0 + $0xf0] sm:$0x1]
    %v55 = vld [vmem:[%s0 + $0xf8] sm:$0x1]
    %v56 = vld [vmem:[%s0 + $0x100] sm:$0x1]
    %v57 = vld [vmem:[%s0 + $0x108] sm:$0x1]
    %v58 = vld [vmem:[%s0 + $0x110] sm:$0x1]
    %v59 = vld [vmem:[%s0 + $0x118] sm:$0x1]
    %v60 = vld [vmem:[%s2] sm:$0x3f]
    %62 = vset.pattern.permute.xlu0 0
    %63 = vperm.xlu0 %62, %v60
    %v64 = vpop.permute.xlu0 %63
    %vm66 = vcmask 203776
    %v68 = vsel %vm66, %v23, 0
    %vm70 = vcmask 1040384
    %v72 = vsel %vm70, %v51, 0
    %v75 = vsel %vm70, %v52, 0
    %v78 = vsel %vm70, %v53, 0
    %v81 = vsel %vm70, %v54, 0
    %v84 = vsel %vm70, %v55, 0
    %v87 = vsel %vm70, %v56, 0
    %v90 = vsel %vm70, %v57, 0
    %v93 = vsel %vm70, %v58, 0
    %v96 = vsel %vm70, %v59, 0
    %98 = vmatprep.subr.mxu0 0.0
    %99 = vmatpush1.msra.mxu0 0.0
    %100 = vmatprep.subr.mxu0 0.0
    %101 = vmatpush1.msra.mxu0 0.0
    %102 = vmatprep.subr.mxu0 0.0
    %103 = vmatpush1.msra.mxu0 0.0
    %104 = vmatprep.subr.mxu0 0.0
    %105 = vmatpush1.msra.mxu0 0.0
    %106 = vmatprep.subr.mxu0 0.0
    %107 = vmatpush1.msra.mxu0 0.0
    %108 = vmatprep.subr.mxu0 0.0
    %109 = vmatpush1.msra.mxu0 0.0
    %110 = vmatprep.subr.mxu0 0.0
    %111 = vmatpush1.msra.mxu0 0.0
    %112 = vmatprep.subr.mxu0 0.0
    %113 = vmatpush1.msra.mxu0 0.0
    %114 = vmatprep.subr.mxu0 0.0
    %115 = vmatpush1.msra.mxu0 0.0
    %116 = vmatprep.subr.mxu0 0.0
    %117 = vmatpush1.msra.mxu0 0.0
    %118 = vmatprep.subr.mxu0 0.0
    %119 = vmatpush1.msra.mxu0 0.0
    %120 = vmatprep.subr.mxu0 0.0
    %121 = vmatpush1.msra.mxu0 0.0
    %122 = vmatprep.subr.mxu0 %v75
    %123 = vmatpush1.msra.mxu0 %v72
    %124 = vmatprep.subr.mxu0 %v43
    %125 = vmatpush1.msra.mxu0 %v42
    %126 = vmatprep.subr.mxu0 %v34
    %127 = vmatpush1.msra.mxu0 %v33
    %128 = vmatprep.subr.mxu0 %v25
    %129 = vmatpush1.msra.mxu0 %v24
    %130 = vmatprep.subr.mxu0 0.0
    %131 = vmatpush2.msra.mxu0 0.0
    %132 = vmatprep.subr.mxu0 0.0
    %133 = vmatpush2.msra.mxu0 0.0
    %134 = vmatprep.subr.mxu0 0.0
    %135 = vmatpush2.msra.mxu0 0.0
    %136 = vmatprep.subr.mxu0 0.0
    %137 = vmatpush2.msra.mxu0 0.0
    %138 = vmatprep.subr.mxu0 0.0
    %139 = vmatpush2.msra.mxu0 0.0
    %140 = vmatprep.subr.mxu0 0.0
    %141 = vmatpush2.msra.mxu0 0.0
    %142 = vmatprep.subr.mxu0 0.0
    %143 = vmatpush2.msra.mxu0 0.0
    %144 = vmatprep.subr.mxu0 0.0
    %145 = vmatpush2.msra.mxu0 0.0
    %146 = vmatprep.subr.mxu0 0.0
    %147 = vmatpush2.msra.mxu0 0.0
    %148 = vmatprep.subr.mxu0 0.0
    %149 = vmatpush2.msra.mxu0 0.0
    %150 = vmatprep.subr.mxu0 0.0
    %151 = vmatpush2.msra.mxu0 0.0
    %152 = vmatprep.subr.mxu0 0.0
    %153 = vmatpush2.msra.mxu0 0.0
    %154 = vmatprep.subr.mxu0 0.0
    %155 = vmatpush2.msra.mxu0 0.0
    %156 = vmatprep.subr.mxu0 0.0
    %157 = vmatpush2.msra.mxu0 0.0
    %158 = vmatprep.subr.mxu0 0.0
    %159 = vmatpush2.msra.mxu0 0.0
    %160 = vmatprep.subr.mxu0 0.0
    %161 = vmatpush2.msra.mxu0 0.0
    %162 = vmatprep.mubr.f32.mxu0 0.0
    %163 = vmatmul.mubr.f32.gmra.mxu0 %v68
    %v164 = vpop.f32.mrf.mxu0
    %v165 = vadd.f32 %v64, %v164
    %v166 = vpop.f32.mrf.mxu0
    %v167 = vadd.f32 %v64, %v166
    %168 = vdwg.mxu0
    %169 = vmatprep.subr.mxu0 0.0
    %170 = vmatpush1.msra.mxu0 0.0
    %171 = vmatprep.subr.mxu0 0.0
    %172 = vmatpush1.msra.mxu0 0.0
    %173 = vmatprep.subr.mxu0 0.0
    %174 = vmatpush1.msra.mxu0 0.0
    %175 = vmatprep.subr.mxu0 0.0
    %176 = vmatpush1.msra.mxu0 0.0
    %177 = vmatprep.subr.mxu0 0.0
    %178 = vmatpush1.msra.mxu0 0.0
    %179 = vmatprep.subr.mxu0 0.0
    %180 = vmatpush1.msra.mxu0 0.0
    %181 = vmatprep.subr.mxu0 0.0
    %182 = vmatpush1.msra.mxu0 0.0
    %183 = vmatprep.subr.mxu0 0.0
    %184 = vmatpush1.msra.mxu0 0.0
    %185 = vmatprep.subr.mxu0 0.0
    %186 = vmatpush1.msra.mxu0 0.0
    %187 = vmatprep.subr.mxu0 0.0
    %188 = vmatpush1.msra.mxu0 0.0
    %189 = vmatprep.subr.mxu0 0.0
    %190 = vmatpush1.msra.mxu0 0.0
    %191 = vmatprep.subr.mxu0 0.0
    %192 = vmatpush1.msra.mxu0 0.0
    %193 = vmatprep.subr.mxu0 %v81
    %194 = vmatpush1.msra.mxu0 %v78
    %195 = vmatprep.subr.mxu0 %v45
    %196 = vmatpush1.msra.mxu0 %v44
    %197 = vmatprep.subr.mxu0 %v36
    %198 = vmatpush1.msra.mxu0 %v35
    %199 = vmatprep.subr.mxu0 %v27
    %200 = vmatpush1.msra.mxu0 %v26
    %201 = vmatprep.subr.mxu0 0.0
    %202 = vmatpush2.msra.mxu0 0.0
    %203 = vmatprep.subr.mxu0 0.0
    %204 = vmatpush2.msra.mxu0 0.0
    %205 = vmatprep.subr.mxu0 0.0
    %206 = vmatpush2.msra.mxu0 0.0
    %207 = vmatprep.subr.mxu0 0.0
    %208 = vmatpush2.msra.mxu0 0.0
    %209 = vmatprep.subr.mxu0 0.0
    %210 = vmatpush2.msra.mxu0 0.0
    %211 = vmatprep.subr.mxu0 0.0
    %212 = vmatpush2.msra.mxu0 0.0
    %213 = vmatprep.subr.mxu0 0.0
    %214 = vmatpush2.msra.mxu0 0.0
    %215 = vmatprep.subr.mxu0 0.0
    %216 = vmatpush2.msra.mxu0 0.0
    %217 = vmatprep.subr.mxu0 0.0
    %218 = vmatpush2.msra.mxu0 0.0
    %219 = vmatprep.subr.mxu0 0.0
    %220 = vmatpush2.msra.mxu0 0.0
    %221 = vmatprep.subr.mxu0 0.0
    %222 = vmatpush2.msra.mxu0 0.0
    %223 = vmatprep.subr.mxu0 0.0
    %224 = vmatpush2.msra.mxu0 0.0
    %225 = vmatprep.subr.mxu0 0.0
    %226 = vmatpush2.msra.mxu0 0.0
    %227 = vmatprep.subr.mxu0 0.0
    %228 = vmatpush2.msra.mxu0 0.0
    %229 = vmatprep.subr.mxu0 0.0
    %230 = vmatpush2.msra.mxu0 0.0
    %231 = vmatprep.subr.mxu0 0.0
    %232 = vmatpush2.msra.mxu0 0.0
    %233 = vmatprep.mubr.f32.mxu0 0.0
    %234 = vmatmul.mubr.f32.gmra.mxu0 %v68
    %v235 = vpop.f32.mrf.mxu0
    %v236 = vadd.f32 %v64, %v235
    %v237 = vpop.f32.mrf.mxu0
    %v238 = vadd.f32 %v64, %v237
    %239 = vdwg.mxu0
    %240 = vmatprep.subr.mxu0 0.0
    %241 = vmatpush1.msra.mxu0 0.0
    %242 = vmatprep.subr.mxu0 0.0
    %243 = vmatpush1.msra.mxu0 0.0
    %244 = vmatprep.subr.mxu0 0.0
    %245 = vmatpush1.msra.mxu0 0.0
    %246 = vmatprep.subr.mxu0 0.0
    %247 = vmatpush1.msra.mxu0 0.0
    %248 = vmatprep.subr.mxu0 0.0
    %249 = vmatpush1.msra.mxu0 0.0
    %250 = vmatprep.subr.mxu0 0.0
    %251 = vmatpush1.msra.mxu0 0.0
    %252 = vmatprep.subr.mxu0 0.0
    %253 = vmatpush1.msra.mxu0 0.0
    %254 = vmatprep.subr.mxu0 0.0
    %255 = vmatpush1.msra.mxu0 0.0
    %256 = vmatprep.subr.mxu0 0.0
    %257 = vmatpush1.msra.mxu0 0.0
    %258 = vmatprep.subr.mxu0 0.0
    %259 = vmatpush1.msra.mxu0 0.0
    %260 = vmatprep.subr.mxu0 0.0
    %261 = vmatpush1.msra.mxu0 0.0
    %262 = vmatprep.subr.mxu0 0.0
    %263 = vmatpush1.msra.mxu0 0.0
    %264 = vmatprep.subr.mxu0 %v87
    %265 = vmatpush1.msra.mxu0 %v84
    %266 = vmatprep.subr.mxu0 %v47
    %267 = vmatpush1.msra.mxu0 %v46
    %268 = vmatprep.subr.mxu0 %v38
    %269 = vmatpush1.msra.mxu0 %v37
    %270 = vmatprep.subr.mxu0 %v29
    %271 = vmatpush1.msra.mxu0 %v28
    %272 = vmatprep.subr.mxu0 0.0
    %273 = vmatpush2.msra.mxu0 0.0
    %274 = vmatprep.subr.mxu0 0.0
    %275 = vmatpush2.msra.mxu0 0.0
    %276 = vmatprep.subr.mxu0 0.0
    %277 = vmatpush2.msra.mxu0 0.0
    %278 = vmatprep.subr.mxu0 0.0
    %279 = vmatpush2.msra.mxu0 0.0
    %280 = vmatprep.subr.mxu0 0.0
    %281 = vmatpush2.msra.mxu0 0.0
    %282 = vmatprep.subr.mxu0 0.0
    %283 = vmatpush2.msra.mxu0 0.0
    %284 = vmatprep.subr.mxu0 0.0
    %285 = vmatpush2.msra.mxu0 0.0
    %286 = vmatprep.subr.mxu0 0.0
    %287 = vmatpush2.msra.mxu0 0.0
    %288 = vmatprep.subr.mxu0 0.0
    %289 = vmatpush2.msra.mxu0 0.0
    %290 = vmatprep.subr.mxu0 0.0
    %291 = vmatpush2.msra.mxu0 0.0
    %292 = vmatprep.subr.mxu0 0.0
    %293 = vmatpush2.msra.mxu0 0.0
    %294 = vmatprep.subr.mxu0 0.0
    %295 = vmatpush2.msra.mxu0 0.0
    %296 = vmatprep.subr.mxu0 0.0
    %297 = vmatpush2.msra.mxu0 0.0
    %298 = vmatprep.subr.mxu0 0.0
    %299 = vmatpush2.msra.mxu0 0.0
    %300 = vmatprep.subr.mxu0 0.0
    %301 = vmatpush2.msra.mxu0 0.0
    %302 = vmatprep.subr.mxu0 0.0
    %303 = vmatpush2.msra.mxu0 0.0
    %304 = vmatprep.mubr.f32.mxu0 0.0
    %305 = vmatmul.mubr.f32.gmra.mxu0 %v68
    %v306 = vpop.f32.mrf.mxu0
    %v307 = vadd.f32 %v64, %v306
    %v308 = vpop.f32.mrf.mxu0
    %v309 = vadd.f32 %v64, %v308
    %310 = vdwg.mxu0
    %311 = vmatprep.subr.mxu0 0.0
    %312 = vmatpush1.msra.mxu0 0.0
    %313 = vmatprep.subr.mxu0 0.0
    %314 = vmatpush1.msra.mxu0 0.0
    %315 = vmatprep.subr.mxu0 0.0
    %316 = vmatpush1.msra.mxu0 0.0
    %317 = vmatprep.subr.mxu0 0.0
    %318 = vmatpush1.msra.mxu0 0.0
    %319 = vmatprep.subr.mxu0 0.0
    %320 = vmatpush1.msra.mxu0 0.0
    %321 = vmatprep.subr.mxu0 0.0
    %322 = vmatpush1.msra.mxu0 0.0
    %323 = vmatprep.subr.mxu0 0.0
    %324 = vmatpush1.msra.mxu0 0.0
    %325 = vmatprep.subr.mxu0 0.0
    %326 = vmatpush1.msra.mxu0 0.0
    %327 = vmatprep.subr.mxu0 0.0
    %328 = vmatpush1.msra.mxu0 0.0
    %329 = vmatprep.subr.mxu0 0.0
    %330 = vmatpush1.msra.mxu0 0.0
    %331 = vmatprep.subr.mxu0 0.0
    %332 = vmatpush1.msra.mxu0 0.0
    %333 = vmatprep.subr.mxu0 0.0
    %334 = vmatpush1.msra.mxu0 0.0
    %335 = vmatprep.subr.mxu0 %v93
    %336 = vmatpush1.msra.mxu0 %v90
    %337 = vmatprep.subr.mxu0 %v49
    %338 = vmatpush1.msra.mxu0 %v48
    %339 = vmatprep.subr.mxu0 %v40
    %340 = vmatpush1.msra.mxu0 %v39
    %341 = vmatprep.subr.mxu0 %v31
    %342 = vmatpush1.msra.mxu0 %v30
    %343 = vmatprep.subr.mxu0 0.0
    %344 = vmatpush2.msra.mxu0 0.0
    %345 = vmatprep.subr.mxu0 0.0
    %346 = vmatpush2.msra.mxu0 0.0
    %347 = vmatprep.subr.mxu0 0.0
    %348 = vmatpush2.msra.mxu0 0.0
    %349 = vmatprep.subr.mxu0 0.0
    %350 = vmatpush2.msra.mxu0 0.0
    %351 = vmatprep.subr.mxu0 0.0
    %352 = vmatpush2.msra.mxu0 0.0
    %353 = vmatprep.subr.mxu0 0.0
    %354 = vmatpush2.msra.mxu0 0.0
    %355 = vmatprep.subr.mxu0 0.0
    %356 = vmatpush2.msra.mxu0 0.0
    %357 = vmatprep.subr.mxu0 0.0
    %358 = vmatpush2.msra.mxu0 0.0
    %359 = vmatprep.subr.mxu0 0.0
    %360 = vmatpush2.msra.mxu0 0.0
    %361 = vmatprep.subr.mxu0 0.0
    %362 = vmatpush2.msra.mxu0 0.0
    %363 = vmatprep.subr.mxu0 0.0
    %364 = vmatpush2.msra.mxu0 0.0
    %365 = vmatprep.subr.mxu0 0.0
    %366 = vmatpush2.msra.mxu0 0.0
    %367 = vmatprep.subr.mxu0 0.0
    %368 = vmatpush2.msra.mxu0 0.0
    %369 = vmatprep.subr.mxu0 0.0
    %370 = vmatpush2.msra.mxu0 0.0
    %371 = vmatprep.subr.mxu0 0.0
    %372 = vmatpush2.msra.mxu0 0.0
    %373 = vmatprep.subr.mxu0 0.0
    %374 = vmatpush2.msra.mxu0 0.0
    %375 = vmatprep.mubr.f32.mxu0 0.0
    %376 = vmatmul.mubr.f32.gmra.mxu0 %v68
    %v377 = vpop.f32.mrf.mxu0
    %v378 = vadd.f32 %v64, %v377
    %v379 = vpop.f32.mrf.mxu0
    %v380 = vadd.f32 %v64, %v379
    %381 = vdwg.mxu0
    %382 = vmatprep.subr.mxu0 0.0
    %383 = vmatpush1.msra.mxu0 0.0
    %384 = vmatprep.subr.mxu0 0.0
    %385 = vmatpush1.msra.mxu0 0.0
    %386 = vmatprep.subr.mxu0 0.0
    %387 = vmatpush1.msra.mxu0 0.0
    %388 = vmatprep.subr.mxu0 0.0
    %389 = vmatpush1.msra.mxu0 0.0
    %390 = vmatprep.subr.mxu0 0.0
    %391 = vmatpush1.msra.mxu0 0.0
    %392 = vmatprep.subr.mxu0 0.0
    %393 = vmatpush1.msra.mxu0 0.0
    %394 = vmatprep.subr.mxu0 0.0
    %395 = vmatpush1.msra.mxu0 0.0
    %396 = vmatprep.subr.mxu0 0.0
    %397 = vmatpush1.msra.mxu0 0.0
    %398 = vmatprep.subr.mxu0 0.0
    %399 = vmatpush1.msra.mxu0 0.0
    %400 = vmatprep.subr.mxu0 0.0
    %401 = vmatpush1.msra.mxu0 0.0
    %402 = vmatprep.subr.mxu0 0.0
    %403 = vmatpush1.msra.mxu0 0.0
    %404 = vmatprep.subr.mxu0 0.0
    %405 = vmatpush1.msra.mxu0 0.0
    %406 = vmatprep.subr.mxu0 0.0
    %407 = vmatpush1.msra.mxu0 %v96
    %408 = vmatprep.subr.mxu0 0.0
    %409 = vmatpush1.msra.mxu0 %v50
    %410 = vmatprep.subr.mxu0 0.0
    %411 = vmatpush1.msra.mxu0 %v41
    %412 = vmatprep.subr.mxu0 0.0
    %413 = vmatpush1.msra.mxu0 %v32
    %414 = vmatprep.subr.mxu0 0.0
    %415 = vmatpush2.msra.mxu0 0.0
    %416 = vmatprep.subr.mxu0 0.0
    %417 = vmatpush2.msra.mxu0 0.0
    %418 = vmatprep.subr.mxu0 0.0
    %419 = vmatpush2.msra.mxu0 0.0
    %420 = vmatprep.subr.mxu0 0.0
    %421 = vmatpush2.msra.mxu0 0.0
    %422 = vmatprep.subr.mxu0 0.0
    %423 = vmatpush2.msra.mxu0 0.0
    %424 = vmatprep.subr.mxu0 0.0
    %425 = vmatpush2.msra.mxu0 0.0
    %426 = vmatprep.subr.mxu0 0.0
    %427 = vmatpush2.msra.mxu0 0.0
    %428 = vmatprep.subr.mxu0 0.0
    %429 = vmatpush2.msra.mxu0 0.0
    %430 = vmatprep.subr.mxu0 0.0
    %431 = vmatpush2.msra.mxu0 0.0
    %432 = vmatprep.subr.mxu0 0.0
    %433 = vmatpush2.msra.mxu0 0.0
    %434 = vmatprep.subr.mxu0 0.0
    %435 = vmatpush2.msra.mxu0 0.0
    %436 = vmatprep.subr.mxu0 0.0
    %437 = vmatpush2.msra.mxu0 0.0
    %438 = vmatprep.subr.mxu0 0.0
    %439 = vmatpush2.msra.mxu0 0.0
    %440 = vmatprep.subr.mxu0 0.0
    %441 = vmatpush2.msra.mxu0 0.0
    %442 = vmatprep.subr.mxu0 0.0
    %443 = vmatpush2.msra.mxu0 0.0
    %444 = vmatprep.subr.mxu0 0.0
    %445 = vmatpush2.msra.mxu0 0.0
    %446 = vmatprep.mubr.f32.mxu0 0.0
    %447 = vmatmul.mubr.f32.gmra.mxu0 %v68
    %v448 = vpop.f32.mrf.mxu0
    %v449 = vadd.f32 %v64, %v448
    %v450 = vpop.f32.mrf.mxu0
    %451 = vdwg.mxu0
    %v452 = vmax.f32 %v165, 0.0
    %v453 = vmax.f32 %v167, 0.0
    %v454 = vmax.f32 %v236, 0.0
    %v455 = vmax.f32 %v238, 0.0
    %v456 = vmax.f32 %v307, 0.0
    %v457 = vmax.f32 %v309, 0.0
    %v458 = vmax.f32 %v378, 0.0
    %v459 = vmax.f32 %v380, 0.0
    %v460 = vmax.f32 %v449, 0.0
    %vm461 = vcmp.eq.f32.partialorder %v452, 0.0
    %vm462 = vcmp.eq.f32.partialorder %v453, 0.0
    %vm463 = vcmp.eq.f32.partialorder %v454, 0.0
    %vm464 = vcmp.eq.f32.partialorder %v455, 0.0
    %vm465 = vcmp.eq.f32.partialorder %v456, 0.0
    %vm466 = vcmp.eq.f32.partialorder %v457, 0.0
    %vm467 = vcmp.eq.f32.partialorder %v458, 0.0
    %vm468 = vcmp.eq.f32.partialorder %v459, 0.0
    %vm469 = vcmp.eq.f32.partialorder %v460, 0.0
    %v470 = vsel %vm461, 1, 0
    %v471 = vsel %vm462, 1, 0
    %v472 = vsel %vm463, 1, 0
    %v473 = vsel %vm464, 1, 0
    %v474 = vsel %vm465, 1, 0
    %v475 = vsel %vm466, 1, 0
    %v476 = vsel %vm467, 1, 0
    %v477 = vsel %vm468, 1, 0
    %v478 = vsel %vm469, 1, 0
    %vm479 = vmpackc.low %vm461, %vm461
    %vm480 = vmpackc.even %vm479, %vm479
    %vm481 = vmpackc.low %vm462, %vm462
    %vm482 = vmpackc.even %vm481, %vm481
    %vm483 = vmpackc.low %vm463, %vm463
    %vm484 = vmpackc.even %vm483, %vm483
    %vm485 = vmpackc.low %vm464, %vm464
    %vm486 = vmpackc.even %vm485, %vm485
    %vm487 = vmpackc.low %vm465, %vm465
    %vm488 = vmpackc.even %vm487, %vm487
    %vm489 = vmpackc.low %vm466, %vm466
    %vm490 = vmpackc.even %vm489, %vm489
    %vm491 = vmpackc.low %vm467, %vm467
    %vm492 = vmpackc.even %vm491, %vm491
    %vm493 = vmpackc.low %vm468, %vm468
    %vm494 = vmpackc.even %vm493, %vm493
    %vm495 = vmpackc.low %vm469, %vm469
    %vm496 = vmpackc.even %vm495, %vm495
    %v497 = vsel %vm480, 16843009, 0
    %v498 = vsel %vm482, 16843009, 0
    %v499 = vsel %vm484, 16843009, 0
    %v500 = vsel %vm486, 16843009, 0
    %v501 = vsel %vm488, 16843009, 0
    %v502 = vsel %vm490, 16843009, 0
    %v503 = vsel %vm492, 16843009, 0
    %v504 = vsel %vm494, 16843009, 0
    %v505 = vsel %vm496, 16843009, 0
    %v506 = vunpack.c.0.s8 %v497
    %v507 = vunpack.c.0.s8 %v498
    %v508 = vunpack.c.0.s8 %v499
    %v509 = vunpack.c.0.s8 %v500
    %v510 = vunpack.c.0.s8 %v501
    %v511 = vunpack.c.0.s8 %v502
    %v512 = vunpack.c.0.s8 %v503
    %v513 = vunpack.c.0.s8 %v504
    %v514 = vunpack.c.0.s8 %v505
    %v515 = vpack.c.b16 %v507, %v506
    %v516 = vpack.c.b16 %v509, %v508
    %v517 = vpack.c.b8 %v516, %v515
    %v518 = vpack.c.b16 %v511, %v510
    %v519 = vpack.c.b16 %v513, %v512
    %v520 = vpack.c.b8 %v519, %v518
    %v521 = vpack.c.b16 %v514, %v514
    %v522 = vpack.c.b8 %v521, %v521
    %vm523 = vcmask 1041408
    %vm524 = vsmask.f32 1280
    %vm525 = vmand %vm523, %vm524
    %vm526 = vcmask 1043458
    %vm527 = vsmask.f32 3328
    %vm528 = vmand %vm526, %vm527
    %vm529 = vmor %vm528, %vm525
    %vm530 = vcmask 1045508
    %vm531 = vsmask.f32 5376
    %vm532 = vmand %vm530, %vm531
    %vm533 = vmor %vm532, %vm529
    %vm534 = vcmask 1047558
    %vm535 = vsmask.f32 7424
    %vm536 = vmand %vm534, %vm535
    %vm537 = vmor %vm536, %vm533
    %v538 = vld [vmem:[%s4] sm:$0xff]
    %v539 = vsel %vm537, %v517, %v538
    %540 = vst [vmem:[%s4] sm:$0xff] %v539
    %v541 = vld [vmem:[%s4 + $0x8] sm:$0xff]
    %v542 = vsel %vm537, %v520, %v541
    %543 = vst [vmem:[%s4 + $0x8] sm:$0xff] %v542
    %v544 = vld [vmem:[%s4 + $0x10] sm:$0x3]
    %v545 = vsel %vm525, %v522, %v544
    %546 = vst [vmem:[%s4 + $0x10] sm:$0x3] %v545
    %vm547 = vcmask 1045504
    %v548 = vsel %vm547, %v470, 0
    %v549 = vsel %vm547, %v471, 0
    %v550 = vsel %vm547, %v472, 0
    %v551 = vsel %vm547, %v473, 0
    %v552 = vsel %vm547, %v474, 0
    %v553 = vadd.s32 %v548, %v552
    %v554 = vsel %vm547, %v475, 0
    %v555 = vadd.s32 %v549, %v554
    %v556 = vsel %vm547, %v476, 0
    %v557 = vadd.s32 %v550, %v556
    %v558 = vsel %vm547, %v477, 0
    %v559 = vadd.s32 %v551, %v558
    %v560 = vsel %vm547, %v478, 0
    %v561 = vadd.s32 %v553, %v560
    %v562 = vadd.s32 %v561, %v555
    %v563 = vadd.s32 %v557, %v559
    %v564 = vadd.s32 %v562, %v563
    %v565 = vand.u32 %v564, 65535
    %v566 = vshrl.u32 %v564, 16
    %v567 = vcvt.s32.f32 %v565
    %v568 = vcvt.s32.f32 %v566
    %569 = vadd.xlane.f32.xlu0 %v567
    %v570 = vpop.xlane.xlu0 %569
    %571 = vadd.xlane.f32.xlu0 %v568
    %v572 = vpop.xlane.xlu0 %571
    %v573 = vcvt.f32.s32 %v570
    %v574 = vcvt.f32.s32 %v572
    %v575 = vshll.u32 %v574, 16
    %v576 = vadd.s32 %v575, %v573
    %v577 = vrot.slane %v576, 4
    %v578 = vadd.s32 %v576, %v577
    %v579 = vrot.slane %v578, 2
    %v580 = vadd.s32 %v578, %v579
    %v581 = vrot.slane %v580, 1
    %v582 = vadd.s32 %v580, %v581
    %s583 = vtos %v582
    %s584 = scalar_lea.smem [#allocation2], 0
    %585 = sst [smem:[%s584]] %s583
    %v586 = vmul.f32 %v452, 0.5
    %v587 = vmul.f32 %v453, 0.5
    %v588 = vmul.f32 %v454, 0.5
    %v589 = vmul.f32 %v455, 0.5
    %v590 = vmul.f32 %v456, 0.5
    %v591 = vmul.f32 %v457, 0.5
    %v592 = vmul.f32 %v458, 0.5
    %v593 = vmul.f32 %v459, 0.5
    %v594 = vmul.f32 %v460, 0.5
    %v595 = vtanh.pop %v586
    %v596 = vtanh.pop %v587
    %v597 = vtanh.pop %v588
    %v598 = vtanh.pop %v589
    %v599 = vtanh.pop %v590
    %v600 = vtanh.pop %v591
    %v601 = vtanh.pop %v592
    %v602 = vtanh.pop %v593
    %v603 = vtanh.pop %v594
    %v604 = vsel %vm547, %v595, 0.0
    %v605 = vsel %vm547, %v596, 0.0
    %v606 = vadd.f32 %v604, %v605
    %v607 = vsel %vm547, %v597, 0.0
    %v608 = vadd.f32 %v606, %v607
    %v609 = vsel %vm547, %v598, 0.0
    %v610 = vadd.f32 %v608, %v609
    %v611 = vsel %vm547, %v599, 0.0
    %v612 = vadd.f32 %v610, %v611
    %v613 = vsel %vm547, %v600, 0.0
    %v614 = vadd.f32 %v612, %v613
    %v615 = vsel %vm547, %v601, 0.0
    %v616 = vadd.f32 %v614, %v615
    %v617 = vsel %vm547, %v602, 0.0
    %v618 = vadd.f32 %v616, %v617
    %v619 = vsel %vm547, %v603, 0.0
    %v620 = vadd.f32 %v618, %v619
    %621 = vadd.xlane.f32.xlu0 %v620
    %v622 = vpop.xlane.xlu0 %621
    %v623 = vrot.slane %v622, 4
    %v624 = vadd.f32 %v622, %v623
    %v625 = vrot.slane %v624, 2
    %v626 = vadd.f32 %v624, %v625
    %v627 = vrot.slane %v626, 1
    %v628 = vadd.f32 %v626, %v627
    %s629 = vtos %v628
    %s630 = scalar_lea.smem [#allocation4], 0
    %631 = sst [smem:[%s630]] %s629
    %635 = vrot.lane.b32.xlu0 %v454, 96
    %v636 = vpop.permute.xlu0 %635
    %637 = vrot.lane.b32.xlu0 %v455, 96
    %v638 = vpop.permute.xlu0 %637
    %639 = vrot.lane.b32.xlu0 %v456, 96
    %v640 = vpop.permute.xlu0 %639
    %vm641 = vcmask 785408
    %v642 = vsel %vm641, %v636, %v638
    %v643 = vsel %vm641, %v638, %v640
    %v647 = vmax.f32 %v452, %v642
    %v648 = vmax.f32 %v453, %v643
    %v649 = vmax.f32 %v454, %v640
    %652 = vrot.lane.b32.xlu0 %v456, 64
    %v653 = vpop.permute.xlu0 %652
    %654 = vrot.lane.b32.xlu0 %v457, 64
    %v655 = vpop.permute.xlu0 %654
    %656 = vrot.lane.b32.xlu0 %v458, 64
    %v657 = vpop.permute.xlu0 %656
    %vm658 = vcmask 523264
    %v659 = vsel %vm658, %v653, %v655
    %v660 = vsel %vm658, %v655, %v657
    %v664 = vmax.f32 %v647, %v659
    %v665 = vmax.f32 %v648, %v660
    %v666 = vmax.f32 %v649, %v657
    %669 = vrot.lane.b32.xlu0 %v458, 32
    %v670 = vpop.permute.xlu0 %669
    %671 = vrot.lane.b32.xlu0 %v459, 32
    %v672 = vpop.permute.xlu0 %671
    %673 = vrot.lane.b32.xlu0 %v460, 32
    %v674 = vpop.permute.xlu0 %673
    %vm675 = vcmask 261120
    %v676 = vsel %vm675, %v670, %v672
    %v677 = vsel %vm675, %v672, %v674
    %v681 = vmax.f32 %v664, %v676
    %v682 = vmax.f32 %v665, %v677
    %v683 = vmax.f32 %v666, %v674
    %684 = vst [vmem:[%s3] sm:$0x3f] %v681
    %685 = vst [vmem:[%s3 + $0x8] sm:$0x3f] %v682
    %vm686 = vcmask 259072
    %687 = vst.msk [vmem:[%s3 + $0x10] sm:$0x3f] %vm686, %v683
    %vm688 = vcmp.eq.f32.partialorder %v681, 0.0
    %vm689 = vcmp.eq.f32.partialorder %v682, 0.0
    %vm690 = vcmp.eq.f32.partialorder %v683, 0.0
    %v691 = vsel %vm688, 1, 0
    %v692 = vsel %vm689, 1, 0
    %v693 = vsel %vm690, 1, 0
    %vm694 = vmpackc.low %vm688, %vm688
    %vm695 = vmpackc.even %vm694, %vm694
    %vm696 = vmpackc.low %vm689, %vm689
    %vm697 = vmpackc.even %vm696, %vm696
    %vm698 = vmpackc.low %vm690, %vm690
    %vm699 = vmpackc.even %vm698, %vm698
    %v700 = vsel %vm695, 16843009, 0
    %v701 = vsel %vm697, 16843009, 0
    %v702 = vsel %vm699, 16843009, 0
    %v703 = vunpack.c.0.s8 %v700
    %v704 = vunpack.c.0.s8 %v701
    %v705 = vunpack.c.0.s8 %v702
    %v706 = vpack.c.b16 %v704, %v703
    %v707 = vpack.c.b16 %v705, %v705
    %v708 = vpack.c.b8 %v707, %v706
    %vm709 = vcmask 259076
    %vm710 = vmand %vm709, %vm531
    %vm711 = vmor %vm710, %vm529
    %v712 = vld [vmem:[%s5] sm:$0x3f]
    %v713 = vsel %vm711, %v708, %v712
    %714 = vst [vmem:[%s5] sm:$0x3f] %v713
    %v715 = vsel %vm547, %v691, 0
    %v716 = vsel %vm547, %v692, 0
    %v717 = vsel %vm686, %v693, 0
    %v718 = vadd.s32 %v715, %v716
    %v719 = vadd.s32 %v718, %v717
    %v720 = vand.u32 %v719, 65535
    %v721 = vshrl.u32 %v719, 16
    %v722 = vcvt.s32.f32 %v720
    %v723 = vcvt.s32.f32 %v721
    %724 = vadd.xlane.f32.xlu0 %v722
    %v725 = vpop.xlane.xlu0 %724
    %726 = vadd.xlane.f32.xlu0 %v723
    %v727 = vpop.xlane.xlu0 %726
    %v728 = vcvt.f32.s32 %v725
    %v729 = vcvt.f32.s32 %v727
    %v730 = vshll.u32 %v729, 16
    %v731 = vadd.s32 %v730, %v728
    %v732 = vrot.slane %v731, 4
    %v733 = vadd.s32 %v731, %v732
    %v734 = vrot.slane %v733, 2
    %v735 = vadd.s32 %v733, %v734
    %v736 = vrot.slane %v735, 1
    %v737 = vadd.s32 %v735, %v736
    %s738 = vtos %v737
    %s739 = scalar_lea.smem [#allocation2], 1
    %740 = sst [smem:[%s739]] %s738
    %v741 = vmul.f32 %v681, 0.5
    %v742 = vmul.f32 %v682, 0.5
    %v743 = vmul.f32 %v683, 0.5
    %v744 = vtanh.pop %v741
    %v745 = vtanh.pop %v742
    %v746 = vtanh.pop %v743
    %v747 = vsel %vm547, %v744, 0.0
    %v748 = vsel %vm547, %v745, 0.0
    %v749 = vadd.f32 %v747, %v748
    %v750 = vsel %vm686, %v746, 0.0
    %v751 = vadd.f32 %v749, %v750
    %752 = vadd.xlane.f32.xlu0 %v751
    %v753 = vpop.xlane.xlu0 %752
    %v754 = vrot.slane %v753, 4
    %v755 = vadd.f32 %v753, %v754
    %v756 = vrot.slane %v755, 2
    %v757 = vadd.f32 %v755, %v756
    %v758 = vrot.slane %v757, 1
    %v759 = vadd.f32 %v757, %v758
    %s760 = vtos %v759
    %s761 = scalar_lea.smem [#allocation4], 1
    %762 = sst [smem:[%s761]] %s760
    // Predicated region
    $region14: #{lenet5_forward.2} parent=1 // pred_check
      _
    $region15: #{lenet5_forward.2} parent=1 // pred_check_branch
      %764 = sbr.rel (0) target = $region17
    $region16: #{lenet5_forward.2} parent=1 // pred_region
      _
    $region17: #{lenet5_forward.2} parent=1 // pred_fallthru
      _
    // Predicated region
    $region18: #{lenet5_forward.2} parent=1 // pred_check
      _
    $region19: #{lenet5_forward.2} parent=1 // pred_check_branch
      %766 = sbr.rel (0) target = $region21
    $region20: #{lenet5_forward.2} parent=1 // pred_region
      _
    $region21: #{lenet5_forward.2} parent=1 // pred_fallthru
      _
    // Predicated region
    $region22: #{lenet5_forward.2} parent=1 // pred_check
      _
    $region23: #{lenet5_forward.2} parent=1 // pred_check_branch
      %768 = sbr.rel (0) target = $region25
    $region24: #{lenet5_forward.2} parent=1 // pred_region
      _
    $region25: #{lenet5_forward.2} parent=1 // pred_fallthru
      _
    // Predicated region
    $region26: #{lenet5_forward.2} parent=1 // pred_check
      _
    $region27: #{lenet5_forward.2} parent=1 // pred_check_branch
      %770 = sbr.rel (0) target = $region29
    $region28: #{lenet5_forward.2} parent=1 // pred_region
      %s772 = ssub.s32 16, 16
      %773 = vsyncadd [#allocation3], %s772
      %s775 = sshll.u32 %s6, 4
      %s776 = int_to_ptr.vmem [resolvable:$true] %s775
      %778 = dma.smem_to_vmem [#allocation2], 16, %s776, [#allocation3]
    $region29: #{lenet5_forward.2} parent=1 // pred_fallthru
      _
    // Predicated region
    $region30: #{lenet5_forward.2} parent=1 // pred_check
      _
    $region31: #{lenet5_forward.2} parent=1 // pred_check_branch
      %780 = sbr.rel (0) target = $region33
    $region32: #{lenet5_forward.2} parent=1 // pred_region
      %s782 = ssub.s32 16, 16
      %783 = vsyncadd [#allocation5], %s782
      %s785 = sshll.u32 %s7, 4
      %s786 = int_to_ptr.vmem [resolvable:$true] %s785
      %788 = dma.smem_to_vmem [#allocation4], 16, %s786, [#allocation5]
    $region33: #{lenet5_forward.2} parent=1 // pred_fallthru
      _
    // Predicated region
    $region34: #{lenet5_forward.2} parent=1 // pred_check
      _
    $region35: #{lenet5_forward.2} parent=1 // pred_check_branch
      %790 = sbr.rel (0) target = $region37
    $region36: #{lenet5_forward.2} parent=1 // pred_region
      _
    $region37: #{lenet5_forward.2} parent=1 // pred_fallthru
      _
    // Predicated region
    $region38: #{lenet5_forward.2} parent=1 // pred_check
      _
    $region39: #{lenet5_forward.2} parent=1 // pred_check_branch
      %792 = sbr.rel (0) target = $region41
    $region40: #{lenet5_forward.2} parent=1 // pred_region
      _
    $region41: #{lenet5_forward.2} parent=1 // pred_fallthru
      _
    // Predicated region
    $region42: #{lenet5_forward.2} parent=1 // pred_check
      _
    $region43: #{lenet5_forward.2} parent=1 // pred_check_branch
      %794 = sbr.rel (0) target = $region45
    $region44: #{lenet5_forward.2} parent=1 // pred_region
      _
    $region45: #{lenet5_forward.2} parent=1 // pred_fallthru
      _
    // Predicated region
    $region46: #{lenet5_forward.2} parent=1 // pred_check
      _
    $region47: #{lenet5_forward.2} parent=1 // pred_check_branch
      %796 = sbr.rel (0) target = $region49
    $region48: #{lenet5_forward.2} parent=1 // pred_region
      %797 = dma.done [#allocation3], 16
    $region49: #{lenet5_forward.2} parent=1 // pred_fallthru
      _
    // Predicated region
    $region50: #{lenet5_forward.2} parent=1 // pred_check
      _
    $region51: #{lenet5_forward.2} parent=1 // pred_check_branch
      %799 = sbr.rel (0) target = $region53
    $region52: #{lenet5_forward.2} parent=1 // pred_region
      %800 = dma.done [#allocation5], 16
    $region53: #{lenet5_forward.2} parent=1 // pred_fallthru
      _
    %801 = sfence
    %802 = vsyncpa [#allocation3], 1
    %803 = vsyncpa [#allocation5], 1

// kernel: lenet5_forward.3
$region0: #{lenet5_forward.3}
  #allocation0 [shape = 'u32[]', space=smem, size = 0x4, offset = 0x4, fixed_abs, tag = 'smem constant byte address 0x4 - core index']
  #allocation1 [shape = 'u32[144,128]{1,0:T(1,128)}', space=vmem, size = 0x12000, scoped, tag = 'internal scratch']
  #allocation2 [shape = 'f32[2,256]{1,0:T(2,128)}', space=vmem, size = 0x800, scoped, tag = 'scratch operand']
  %s0 = inlined_call_operand.vmem [shape: f32[150,128], index: 0, kind: input, shape index: {}]
  %s1 = inlined_call_operand.vmem [shape: f32[16,150], index: 1, kind: input, shape index: {}]
  %s2 = inlined_call_operand.vmem [shape: f32[16,1], index: 2, kind: input, shape index: {}]
  %s3 = inlined_call_operand.vmem [shape: f32[120,256], index: 3, kind: input, shape index: {}]
  %s4 = inlined_call_operand.vmem [shape: f32[1,120], index: 4, kind: input, shape index: {}]
  %s5 = inlined_call_operand.vmem [shape: f32[84,120], index: 5, kind: input, shape index: {}]
  %s6 = inlined_call_operand.vmem [shape: f32[1,84], index: 6, kind: input, shape index: {}]
  %s7 = inlined_call_operand.vmem [shape: f32[10,84], index: 7, kind: input, shape index: {}]
  %s8 = inlined_call_operand.vmem [shape: f32[1,10], index: 8, kind: input, shape index: {}]
  %s9 = inlined_call_operand.hbm [shape: f32[2,10], index: 9, kind: output, shape index: {0}]
  %s10 = inlined_call_operand.vmem [shape: u8[16,128], index: 10, kind: output, shape index: {1}]
  %s11 = inlined_call_operand.vmem [shape: u8[2,256], index: 11, kind: output, shape index: {2}]
  %s12 = inlined_call_operand.vmem [shape: u8[2,120], index: 12, kind: output, shape index: {3}]
  %s13 = inlined_call_operand.vmem [shape: u8[2,84], index: 13, kind: output, shape index: {4}]
  %s14 = inlined_call_operand.vmem [shape: u8[2,10], index: 14, kind: output, shape index: {5}]
  %s15 = inlined_call_operand.vmem [shape: s32[5], index: 15, kind: output, shape index: {6}]
  %s16 = inlined_call_operand.vmem [shape: f32[5], index: 16, kind: output, shape index: {7}]
  %17 = xla_tuple %s9, %s10, %s11, %s12, %s13, %s14, %s15, %s16
  %s18 = sld [smem:[#allocation0]]
  $region102: #{lenet5_forward.3} parent=0
    _
  %s20 = ssub.s32 1, %s18
  %s21 = scalar_select 0, %s20, %s18
  $region1: #{lenet5_forward.3} parent=0
    #allocation3 [shape = 'u8[1024]{0}', space=vmem, size = 0x400, scoped, tag = 'output window, operand 0, single buffered']
    #allocation4 [shape = 's32[1]{0}', space=sflag, size = 0x4, scoped, tag = 'scoped memory for lenet5_forward.3']
    #allocation5 [shape = 's32[1]{0}', space=sflag, size = 0x4, scoped, tag = 'scoped memory for lenet5_forward.3']
    #allocation6 [shape = 'u8[512]{0}', space=smem, size = 0x200, scoped, tag = 'output window, operand 6, single buffered']
    #allocation7 [shape = 'u8[512]{0}', space=smem, size = 0x200, scoped, tag = 'output window, operand 7, single buffered']
    #allocation8 [shape = 's32[1]{0}', space=sflag, size = 0x4, scoped, tag = 'scoped memory for lenet5_forward.3']
    %22 = vsyncpa [#allocation4], 0
    %23 = vsyncpa [#allocation5], 0
    %24 = vsyncpa [#allocation8], 0
    // Predicated region
    $region2: #{lenet5_forward.3} parent=1 // pred_check
      _
    $region3: #{lenet5_forward.3} parent=1 // pred_check_branch
      %26 = sbr.rel (0) target = $region5
    $region4: #{lenet5_forward.3} parent=1 // pred_region
      _
    $region5: #{lenet5_forward.3} parent=1 // pred_fallthru
      _
    // Predicated region
    $region6: #{lenet5_forward.3} parent=1 // pred_check
      _
    $region7: #{lenet5_forward.3} parent=1 // pred_check_branch
      %28 = sbr.rel (0) target = $region9
    $region8: #{lenet5_forward.3} parent=1 // pred_region
      _
    $region9: #{lenet5_forward.3} parent=1 // pred_fallthru
      _
    // Predicated region
    $region10: #{lenet5_forward.3} parent=1 // pred_check
      _
    $region11: #{lenet5_forward.3} parent=1 // pred_check_branch
      %30 = sbr.rel (0) target = $region13
    $region12: #{lenet5_forward.3} parent=1 // pred_region
      _
    $region13: #{lenet5_forward.3} parent=1 // pred_fallthru
      _
    // Predicated region
    $region14: #{lenet5_forward.3} parent=1 // pred_check
      _
    $region15: #{lenet5_forward.3} parent=1 // pred_check_branch
      %32 = sbr.rel (0) target = $region17
    $region16: #{lenet5_forward.3} parent=1 // pred_region
      _
    $region17: #{lenet5_forward.3} parent=1 // pred_fallthru
      _
    // Predicated region
    $region18: #{lenet5_forward.3} parent=1 // pred_check
      _
    $region19: #{lenet5_forward.3} parent=1 // pred_check_branch
      %34 = sbr.rel (0) target = $region21
    $region20: #{lenet5_forward.3} parent=1 // pred_region
      _
    $region21: #{lenet5_forward.3} parent=1 // pred_fallthru
      _
    // Predicated region
    $region22: #{lenet5_forward.3} parent=1 // pred_check
      _
    $region23: #{lenet5_forward.3} parent=1 // pred_check_branch
      %36 = sbr.rel (0) target = $region25
    $region24: #{lenet5_forward.3} parent=1 // pred_region
      _
    $region25: #{lenet5_forward.3} parent=1 // pred_fallthru
      _
    // Predicated region
    $region26: #{lenet5_forward.3} parent=1 // pred_check
      _
    $region27: #{lenet5_forward.3} parent=1 // pred_check_branch
      %38 = sbr.rel (0) target = $region29
    $region28: #{lenet5_forward.3} parent=1 // pred_region
      _
    $region29: #{lenet5_forward.3} parent=1 // pred_fallthru
      _
    // Predicated region
    $region30: #{lenet5_forward.3} parent=1 // pred_check
      _
    $region31: #{lenet5_forward.3} parent=1 // pred_check_branch
      %40 = sbr.rel (0) target = $region33
    $region32: #{lenet5_forward.3} parent=1 // pred_region
      _
    $region33: #{lenet5_forward.3} parent=1 // pred_fallthru
      _
    // Predicated region
    $region34: #{lenet5_forward.3} parent=1 // pred_check
      _
    $region35: #{lenet5_forward.3} parent=1 // pred_check_branch
      %42 = sbr.rel (0) target = $region37
    $region36: #{lenet5_forward.3} parent=1 // pred_region
      _
    $region37: #{lenet5_forward.3} parent=1 // pred_fallthru
      _
    %v45 = vld [vmem:[%s1] sm:$0xff]
    %v46 = vld [vmem:[%s1 + $0x8] sm:$0xff]
    %v47 = vld [vmem:[%s1 + $0x10] sm:$0xff]
    %v48 = vld [vmem:[%s1 + $0x18] sm:$0xff]
    %v49 = vld [vmem:[%s0] sm:$0xff]
    %v50 = vld [vmem:[%s0 + $0x8] sm:$0xff]
    %v51 = vld [vmem:[%s0 + $0x10] sm:$0xff]
    %v52 = vld [vmem:[%s0 + $0x18] sm:$0xff]
    %v53 = vld [vmem:[%s0 + $0x20] sm:$0xff]
    %v54 = vld [vmem:[%s0 + $0x28] sm:$0xff]
    %v55 = vld [vmem:[%s0 + $0x30] sm:$0xff]
    %v56 = vld [vmem:[%s0 + $0x38] sm:$0xff]
    %v57 = vld [vmem:[%s0 + $0x40] sm:$0xff]
    %v58 = vld [vmem:[%s0 + $0x48] sm:$0xff]
    %v59 = vld [vmem:[%s0 + $0x50] sm:$0xff]
    %v60 = vld [vmem:[%s0 + $0x58] sm:$0xff]
    %v61 = vld [vmem:[%s0 + $0x60] sm:$0xff]
    %v62 = vld [vmem:[%s0 + $0x68] sm:$0xff]
    %v63 = vld [vmem:[%s0 + $0x70] sm:$0xff]
    %v64 = vld [vmem:[%s0 + $0x78] sm:$0xff]
    %v65 = vld [vmem:[%s0 + $0x80] sm:$0xff]
    %v66 = vld [vmem:[%s0 + $0x88] sm:$0xff]
    %v67 = vld [vmem:[%s0 + $0x90] sm:$0x3f]
    %v68 = vld [vmem:[%s2] sm:$0xff]
    %v69 = vld [vmem:[%s2 + $0x8] sm:$0xff]
    %71 = vset.pattern.permute.xlu0 0
    %72 = vperm.xlu0 %71, %v68
    %v73 = vpop.permute.xlu0 %72
    %76 = vset.pattern.permute.xlu0 0
    %77 = vperm.xlu0 %76, %v69
    %v78 = vpop.permute.xlu0 %77
    %vm80 = vcmask 179200
    %v82 = vsel %vm80, %v46, 0
    %v85 = vsel %vm80, %v48, 0
    %vm87 = vcmask 1045504
    %v89 = vsel %vm87, %v67, 0
    %91 = vmatprep.subr.mxu0 0.0
    %92 = vmatpush1.msra.mxu0 %v64
    %93 = vmatprep.subr.mxu0 0.0
    %94 = vmatpush1.msra.mxu0 %v63
    %95 = vmatprep.subr.mxu0 0.0
    %96 = vmatpush1.msra.mxu0 %v62
    %97 = vmatprep.subr.mxu0 0.0
    %98 = vmatpush1.msra.mxu0 %v61
    %99 = vmatprep.subr.mxu0 0.0
    %100 = vmatpush1.msra.mxu0 %v60
    %101 = vmatprep.subr.mxu0 0.0
    %102 = vmatpush1.msra.mxu0 %v59
    %103 = vmatprep.subr.mxu0 0.0
    %104 = vmatpush1.msra.mxu0 %v58
    %105 = vmatprep.subr.mxu0 0.0
    %106 = vmatpush1.msra.mxu0 %v57
    %107 = vmatprep.subr.mxu0 0.0
    %108 = vmatpush1.msra.mxu0 %v56
    %109 = vmatprep.subr.mxu0 0.0
    %110 = vmatpush1.msra.mxu0 %v55
    %111 = vmatprep.subr.mxu0 0.0
    %112 = vmatpush1.msra.mxu0 %v54
    %113 = vmatprep.subr.mxu0 0.0
    %114 = vmatpush1.msra.mxu0 %v53
    %115 = vmatprep.subr.mxu0 0.0
    %116 = vmatpush1.msra.mxu0 %v52
    %117 = vmatprep.subr.mxu0 0.0
    %118 = vmatpush1.msra.mxu0 %v51
    %119 = vmatprep.subr.mxu0 0.0
    %120 = vmatpush1.msra.mxu0 %v50
    %121 = vmatprep.subr.mxu0 0.0
    %122 = vmatpush1.msra.mxu0 %v49
    %123 = vmatprep.subr.mxu0 0.0
    %124 = vmatpush2.msra.mxu0 0.0
    %125 = vmatprep.subr.mxu0 0.0
    %126 = vmatpush2.msra.mxu0 0.0
    %127 = vmatprep.subr.mxu0 0.0
    %128 = vmatpush2.msra.mxu0 0.0
    %129 = vmatprep.subr.mxu0 0.0
    %130 = vmatpush2.msra.mxu0 0.0
    %131 = vmatprep.subr.mxu0 0.0
    %132 = vmatpush2.msra.mxu0 0.0
    %133 = vmatprep.subr.mxu0 0.0
    %134 = vmatpush2.msra.mxu0 0.0
    %135 = vmatprep.subr.mxu0 0.0
    %136 = vmatpush2.msra.mxu0 0.0
    %137 = vmatprep.subr.mxu0 0.0
    %138 = vmatpush2.msra.mxu0 0.0
    %139 = vmatprep.subr.mxu0 0.0
    %140 = vmatpush2.msra.mxu0 0.0
    %141 = vmatprep.subr.mxu0 0.0
    %142 = vmatpush2.msra.mxu0 0.0
    %143 = vmatprep.subr.mxu0 0.0
    %144 = vmatpush2.msra.mxu0 0.0
    %145 = vmatprep.subr.mxu0 0.0
    %146 = vmatpush2.msra.mxu0 0.0
    %147 = vmatprep.subr.mxu0 0.0
    %148 = vmatpush2.msra.mxu0 0.0
    %149 = vmatprep.subr.mxu0 0.0
    %150 = vmatpush2.msra.mxu0 %v89
    %151 = vmatprep.subr.mxu0 0.0
    %152 = vmatpush2.msra.mxu0 %v66
    %153 = vmatprep.subr.mxu0 0.0
    %154 = vmatpush2.msra.mxu0 %v65
    %155 = vmatprep.mubr.f32.mxu0 %v82
    %156 = vmatmul.mubr.f32.gmra.mxu0 %v45
    %v157 = vpop.f32.mrf.mxu0
    %v158 = vadd.f32 %v73, %v157
    %v159 = vpop.f32.mrf.mxu0
    %160 = vmatprep.mubr.f32.mxu0 %v85
    %161 = vmatmul.mubr.f32.gmra.mxu0 %v47
    %v162 = vpop.f32.mrf.mxu0
    %v163 = vadd.f32 %v78, %v162
    %v164 = vpop.f32.mrf.mxu0
    %165 = vdwg.mxu0
    %v166 = vmax.f32 %v158, 0.0
    %v167 = vmax.f32 %v163, 0.0
    %vm168 = vcmp.eq.f32.partialorder %v166, 0.0
    %vm169 = vcmp.eq.f32.partialorder %v167, 0.0
    %v170 = vsel %vm168, 1, 0
    %v171 = vsel %vm169, 1, 0
    %vm172 = vmpackc.low %vm169, %vm168
    %vm173 = vmpackc.even %vm172, %vm172
    %v174 = vsel %vm173, 16843009, 0
    %v175 = vunpack.c.0.s8 %v174
    %v176 = vunpack.c.1.s8 %v174
    %v177 = vpack.c.b16 %v175, %v175
    %v178 = vpack.c.b8 %v177, %v177
    %v179 = vpack.c.b16 %v176, %v176
    %v180 = vpack.c.b8 %v179, %v179
    %181 = vst [vmem:[%s10] sm:$0x3] %v178
    %182 = vst [vmem:[%s10 + $0x2] sm:$0x3] %v180
    %v183 = vadd.s32 %v170, %v171
    %v184 = vand.u32 %v183, 65535
    %v185 = vshrl.u32 %v183, 16
    %v186 = vcvt.s32.f32 %v184
    %v187 = vcvt.s32.f32 %v185
    %188 = vadd.xlane.f32.xlu0 %v186
    %v189 = vpop.xlane.xlu0 %188
    %190 = vadd.xlane.f32.xlu0 %v187
    %v191 = vpop.xlane.xlu0 %190
    %v192 = vcvt.f32.s32 %v189
    %v193 = vcvt.f32.s32 %v191
    %v194 = vshll.u32 %v193, 16
    %v195 = vadd.s32 %v194, %v192
    %v196 = vrot.slane %v195, 4
    %v197 = vadd.s32 %v195, %v196
    %v198 = vrot.slane %v197, 2
    %v199 = vadd.s32 %v197, %v198
    %v200 = vrot.slane %v199, 1
    %v201 = vadd.s32 %v199, %v200
    %s202 = vtos %v201
    %s203 = scalar_lea.smem [#allocation6], 0
    %204 = sst [smem:[%s203]] %s202
    %v205 = vmul.f32 %v166, 0.5
    %v206 = vmul.f32 %v167, 0.5
    %v207 = vtanh.pop %v205
    %v208 = vtanh.pop %v206
    %v209 = vadd.f32 %v207, %v208
    %210 = vadd.xlane.f32.xlu0 %v209
    %v211 = vpop.xlane.xlu0 %210
    %v212 = vrot.slane %v211, 4
    %v213 = vadd.f32 %v211, %v212
    %v214 = vrot.slane %v213, 2
    %v215 = vadd.f32 %v213, %v214
    %v216 = vrot.slane %v215, 1
    %v217 = vadd.f32 %v215, %v216
    %s218 = vtos %v217
    %s219 = scalar_lea.smem [#allocation7], 0
    %220 = sst [smem:[%s219]] %s218
    %223 = vrot.lane.b32.xlu0 %v166, 112
    %v224 = vpop.permute.xlu0 %223
    %225 = vrot.lane.b32.xlu0 %v167, 112
    %v226 = vpop.permute.xlu0 %225
    %v229 = vmax.f32 %v166, %v224
    %v230 = vmax.f32 %v167, %v226
    %231 = vrot.lane.b32.xlu0 %v166, 96
    %v232 = vpop.permute.xlu0 %231
    %233 = vrot.lane.b32.xlu0 %v167, 96
    %v234 = vpop.permute.xlu0 %233
    %v237 = vmax.f32 %v229, %v232
    %v238 = vmax.f32 %v230, %v234
    %239 = vrot.lane.b32.xlu0 %v166, 80
    %v240 = vpop.permute.xlu0 %239
    %241 = vrot.lane.b32.xlu0 %v167, 80
    %v242 = vpop.permute.xlu0 %241
    %v245 = vmax.f32 %v237, %v240
    %v246 = vmax.f32 %v238, %v242
    %vm247 = vcmask 122880
    %248 = vst.msk [vmem:[#allocation2] sm:$0x1] %vm247, %v245
    %v251 = vunpack.c.l.s4 1983009808
    %v252 = vunpack.c.0.s8 %v251
    %v253 = vlaneseq
    %v254 = vshrl.u32 %v253, 7
    %v255 = vsub.s32 %v252, %v254
    %v256 = vrot.slane %v245, %v255
    %v257 = vrot.slane %v256, 7
    %v258 = vrot.slane %v257, 2
    %259 = vrot.lane.b32.xlu0 %v258, 16
    %v260 = vpop.permute.xlu0 %259
    %vm262 = vcmask 254080
    %263 = vst.msk [vmem:[#allocation2] sm:$0x1] %vm262, %v260
    %v264 = vcombine.high %v256, %v256
    %265 = vrot.lane.b32.xlu0 %v264, 32
    %v266 = vpop.permute.xlu0 %265
    %vm268 = vcmask 385280
    %269 = vst.msk [vmem:[#allocation2] sm:$0x1] %vm268, %v266
    %v270 = vrot.slane %v264, 7
    %v271 = vrot.slane %v270, 2
    %272 = vrot.lane.b32.xlu0 %v271, 48
    %v273 = vpop.permute.xlu0 %272
    %vm275 = vcmask 516480
    %276 = vst.msk [vmem:[#allocation2] sm:$0x1] %vm275, %v273
    %v277 = vcombine.high %v245, %v245
    %v279 = vunpack.c.l.s4 1983009808
    %v280 = vunpack.c.0.s8 %v279
    %v281 = vlaneseq
    %v282 = vshrl.u32 %v281, 7
    %v283 = vsub.s32 %v280, %v282
    %v284 = vrot.slane %v277, %v283
    %285 = vrot.lane.b32.xlu0 %v284, 64
    %v286 = vpop.permute.xlu0 %285
    %vm288 = vcmask 647680
    %289 = vst.msk [vmem:[#allocation2] sm:$0x1] %vm288, %v286
    %v290 = vrot.slane %v284, 7
    %v291 = vrot.slane %v290, 2
    %292 = vrot.lane.b32.xlu0 %v291, 80
    %v293 = vpop.permute.xlu0 %292
    %vm295 = vcmask 778880
    %296 = vst.msk [vmem:[#allocation2] sm:$0x1] %vm295, %v293
    %v297 = vcombine.high %v284, %v284
    %298 = vrot.lane.b32.xlu0 %v297, 96
    %v299 = vpop.permute.xlu0 %298
    %vm301 = vcmask 910080
    %302 = vst.msk [vmem:[#allocation2] sm:$0x1] %vm301, %v299
    %v303 = vrot.slane %v297, 7
    %v304 = vrot.slane %v303, 2
    %305 = vrot.lane.b32.xlu0 %v304, 112
    %v306 = vpop.permute.xlu0 %305
    %vm308 = vcmask 1041280
    %309 = vst.msk [vmem:[#allocation2] sm:$0x1] %vm308, %v306
    %310 = vst.msk [vmem:[#allocation2 + $0x2] sm:$0x1] %vm247, %v246
    %v313 = vunpack.c.l.s4 1983009808
    %v314 = vunpack.c.0.s8 %v313
    %v315 = vlaneseq
    %v316 = vshrl.u32 %v315, 7
    %v317 = vsub.s32 %v314, %v316
    %v318 = vrot.slane %v246, %v317
    %v319 = vrot.slane %v318, 7
    %v320 = vrot.slane %v319, 2
    %321 = vrot.lane.b32.xlu0 %v320, 16
    %v322 = vpop.permute.xlu0 %321
    %324 = vst.msk [vmem:[#allocation2 + $0x2] sm:$0x1] %vm262, %v322
    %v325 = vcombine.high %v318, %v318
    %326 = vrot.lane.b32.xlu0 %v325, 32
    %v327 = vpop.permute.xlu0 %326
    %329 = vst.msk [vmem:[#allocation2 + $0x2] sm:$0x1] %vm268, %v327
    %v330 = vrot.slane %v325, 7
    %v331 = vrot.slane %v330, 2
    %332 = vrot.lane.b32.xlu0 %v331, 48
    %v333 = vpop.permute.xlu0 %332
    %335 = vst.msk [vmem:[#allocation2 + $0x2] sm:$0x1] %vm275, %v333
    %v336 = vcombine.high %v246, %v246
    %v338 = vunpack.c.l.s4 1983009808
    %v339 = vunpack.c.0.s8 %v338
    %v340 = vlaneseq
    %v341 = vshrl.u32 %v340, 7
    %v342 = vsub.s32 %v339, %v341
    %v343 = vrot.slane %v336, %v342
    %344 = vrot.lane.b32.xlu0 %v343, 64
    %v345 = vpop.permute.xlu0 %344
    %347 = vst.msk [vmem:[#allocation2 + $0x2] sm:$0x1] %vm288, %v345
    %v348 = vrot.slane %v343, 7
    %v349 = vrot.slane %v348, 2
    %350 = vrot.lane.b32.xlu0 %v349, 80
    %v351 = vpop.permute.xlu0 %350
    %353 = vst.msk [vmem:[#allocation2 + $0x2] sm:$0x1] %vm295, %v351
    %v354 = vcombine.high %v343, %v343
    %355 = vrot.lane.b32.xlu0 %v354, 96
    %v356 = vpop.permute.xlu0 %355
    %358 = vst.msk [vmem:[#allocation2 + $0x2] sm:$0x1] %vm301, %v356
    %v359 = vrot.slane %v354, 7
    %v360 = vrot.slane %v359, 2
    %361 = vrot.lane.b32.xlu0 %v360, 112
    %v362 = vpop.permute.xlu0 %361
    %364 = vst.msk [vmem:[#allocation2 + $0x2] sm:$0x1] %vm308, %v362
    %365 = vrot.lane.b32.xlu0 %v256, 64
    %v366 = vpop.permute.xlu0 %365
    %368 = vst.msk [vmem:[#allocation2 + $0x1] sm:$0x1] %vm247, %v366
    %369 = vrot.lane.b32.xlu0 %v258, 80
    %v370 = vpop.permute.xlu0 %369
    %372 = vst.msk [vmem:[#allocation2 + $0x1] sm:$0x1] %vm262, %v370
    %373 = vrot.lane.b32.xlu0 %v264, 96
    %v374 = vpop.permute.xlu0 %373
    %376 = vst.msk [vmem:[#allocation2 + $0x1] sm:$0x1] %vm268, %v374
    %377 = vrot.lane.b32.xlu0 %v271, 112
    %v378 = vpop.permute.xlu0 %377
    %380 = vst.msk [vmem:[#allocation2 + $0x1] sm:$0x1] %vm275, %v378
    %382 = vst.msk [vmem:[#allocation2 + $0x1] sm:$0x1] %vm288, %v284
    %383 = vrot.lane.b32.xlu0 %v291, 16
    %v384 = vpop.permute.xlu0 %383
    %386 = vst.msk [vmem:[#allocation2 + $0x1] sm:$0x1] %vm295, %v384
    %387 = vrot.lane.b32.xlu0 %v297, 32
    %v388 = vpop.permute.xlu0 %387
    %390 = vst.msk [vmem:[#allocation2 + $0x1] sm:$0x1] %vm301, %v388
    %391 = vrot.lane.b32.xlu0 %v304, 48
    %v392 = vpop.permute.xlu0 %391
    %394 = vst.msk [vmem:[#allocation2 + $0x1] sm:$0x1] %vm308, %v392
    %395 = vrot.lane.b32.xlu0 %v318, 64
    %v396 = vpop.permute.xlu0 %395
    %398 = vst.msk [vmem:[#allocation2 + $0x3] sm:$0x1] %vm247, %v396
    %399 = vrot.lane.b32.xlu0 %v320, 80
    %v400 = vpop.permute.xlu0 %399
    %402 = vst.msk [vmem:[#allocation2 + $0x3] sm:$0x1] %vm262, %v400
    %403 = vrot.lane.b32.xlu0 %v325, 96
    %v404 = vpop.permute.xlu0 %403
    %406 = vst.msk [vmem:[#allocation2 + $0x3] sm:$0x1] %vm268, %v404
    %407 = vrot.lane.b32.xlu0 %v331, 112
    %v408 = vpop.permute.xlu0 %407
    %410 = vst.msk [vmem:[#allocation2 + $0x3] sm:$0x1] %vm275, %v408
    %412 = vst.msk [vmem:[#allocation2 + $0x3] sm:$0x1] %vm288, %v343
    %413 = vrot.lane.b32.xlu0 %v349, 16
    %v414 = vpop.permute.xlu0 %413
    %416 = vst.msk [vmem:[#allocation2 + $0x3] sm:$0x1] %vm295, %v414
    %417 = vrot.lane.b32.xlu0 %v354, 32
    %v418 = vpop.permute.xlu0 %417
    %420 = vst.msk [vmem:[#allocation2 + $0x3] sm:$0x1] %vm301, %v418
    %421 = vrot.lane.b32.xlu0 %v360, 48
    %v422 = vpop.permute.xlu0 %421
    %424 = vst.msk [vmem:[#allocation2 + $0x3] sm:$0x1] %vm308, %v422
    %v425 = vld [vmem:[#allocation2] sm:$0xf]
    %vm426 = vcmp.eq.f32.partialorder %v425, 0.0
    %v427 = vsel %vm426, 1, 0
    %v429 = vunpack.c.l.s4 1983009808
    %v430 = vunpack.c.0.s8 %v429
    %v431 = vlaneseq
    %v432 = vshrl.u32 %v431, 7
    %v433 = vsub.s32 %v430, %v432
    %v434 = vrot.slane %v427, %v433
    %vm435 = vcmp.ne.s32.totalorder %v434, 0
    %v436 = vsel %vm435, 1, 0
    %v437 = vpack.c.b16 %v436, %v436
    %v438 = vpack.c.b8 %v437, %v437
    %vm439 = vnez %v438
    %v440 = vsel %vm439, 16843009, 0
    %v442 = vunpack.c.l.s4 1966171168
    %v443 = vunpack.c.0.s8 %v442
    %v444 = vlaneseq
    %v445 = vshrl.u32 %v444, 7
    %v446 = vsub.s32 %v443, %v445
    %v447 = vrot.slane %v440, %v446
    %v448 = vcombine.high %v447, %v447
    %v450 = vunpack.c.l.s4 1966171168
    %v451 = vunpack.c.0.s8 %v450
    %v452 = vlaneseq
    %v453 = vshrl.u32 %v452, 7
    %v454 = vsub.s32 %v451, %v453
    %v455 = vrot.slane %v447, %v454
    %v457 = vunpack.c.l.s4 1966171168
    %v458 = vunpack.c.0.s8 %v457
    %v459 = vlaneseq
    %v460 = vshrl.u32 %v459, 7
    %v461 = vsub.s32 %v458, %v460
    %v462 = vrot.slane %v448, %v461
    %vm463 = vnez %v455
    %vm464 = vnez %v462
    %v465 = vsel %vm463, 16843009, 0
    %v466 = vsel %vm464, 16843009, 0
    %v467 = vcombine.low %v465, %v466
    %v469 = vunpack.c.l.s4 1966171168
    %v470 = vunpack.c.0.s8 %v469
    %v471 = vlaneseq
    %v472 = vshrl.u32 %v471, 7
    %v473 = vsub.s32 %v470, %v472
    %v474 = vrot.slane %v467, %v473
    %v476 = vunpack.c.l.s4 1966171168
    %v477 = vunpack.c.0.s8 %v476
    %v478 = vlaneseq
    %v479 = vshrl.u32 %v478, 7
    %v480 = vsub.s32 %v477, %v479
    %v481 = vrot.slane %v474, %v480
    %vm482 = vcmask 1040384
    %vm483 = vsmask.f32 256
    %vm484 = vmand %vm482, %vm483
    %vm485 = vcmask 1041409
    %vm486 = vsmask.f32 1280
    %vm487 = vmand %vm485, %vm486
    %vm488 = vmor %vm487, %vm484
    %v489 = vld [vmem:[%s11] sm:$0x3]
    %v490 = vsel %vm488, %v481, %v489
    %491 = vst [vmem:[%s11] sm:$0x3] %v490
    %v492 = vcombine.high %v434, %v434
    %vm493 = vcmask 1041408
    %v494 = vsel %vm493, %v434, 0
    %v495 = vsel %vm493, %v492, 0
    %v496 = vadd.s32 %v494, %v495
    %v497 = vand.u32 %v496, 65535
    %v498 = vshrl.u32 %v496, 16
    %v499 = vcvt.s32.f32 %v497
    %v500 = vcvt.s32.f32 %v498
    %501 = vadd.xlane.f32.xlu0 %v499
    %v502 = vpop.xlane.xlu0 %501
    %503 = vadd.xlane.f32.xlu0 %v500
    %v504 = vpop.xlane.xlu0 %503
    %v505 = vcvt.f32.s32 %v502
    %v506 = vcvt.f32.s32 %v504
    %v507 = vshll.u32 %v506, 16
    %v508 = vadd.s32 %v507, %v505
    %v509 = vrot.slane %v508, 4
    %v510 = vadd.s32 %v508, %v509
    %v511 = vrot.slane %v510, 2
    %v512 = vadd.s32 %v510, %v511
    %v513 = vrot.slane %v512, 1
    %v514 = vadd.s32 %v512, %v513
    %s515 = vtos %v514
    %s516 = scalar_lea.smem [#allocation6], 1
    %517 = sst [smem:[%s516]] %s515
    %v518 = vmul.f32 %v425, 0.5
    %v519 = vtanh.pop %v518
    %v522 = vunpack.c.l.s4 1983009808
    %v523 = vunpack.c.0.s8 %v522
    %v524 = vlaneseq
    %v525 = vshrl.u32 %v524, 7
    %v526 = vsub.s32 %v523, %v525
    %v527 = vrot.slane %v519, %v526
    %v528 = vcombine.high %v527, %v527
    %v531 = vsel %vm493, %v527, 0.0
    %v532 = vsel %vm493, %v528, 0.0
    %v533 = vadd.f32 %v531, %v532
    %534 = vadd.xlane.f32.xlu0 %v533
    %v535 = vpop.xlane.xlu0 %534
    %v536 = vrot.slane %v535, 4
    %v537 = vadd.f32 %v535, %v536
    %v538 = vrot.slane %v537, 2
    %v539 = vadd.f32 %v537, %v538
    %v540 = vrot.slane %v539, 1
    %v541 = vadd.f32 %v539, %v540
    %s542 = vtos %v541
    %s543 = scalar_lea.smem [#allocation7], 1
    %544 = sst [smem:[%s543]] %s542
    %v545 = vld [vmem:[%s3] sm:$0xff]
    %v546 = vld [vmem:[%s3 + $0x8] sm:$0xff]
    %v547 = vld [vmem:[%s3 + $0x10] sm:$0xff]
    %v548 = vld [vmem:[%s3 + $0x18] sm:$0xff]
    %v549 = vld [vmem:[%s3 + $0x20] sm:$0xff]
    %v550 = vld [vmem:[%s3 + $0x28] sm:$0xff]
    %v551 = vld [vmem:[%s3 + $0x30] sm:$0xff]
    %v552 = vld [vmem:[%s3 + $0x38] sm:$0xff]
    %v553 = vld [vmem:[%s3 + $0x40] sm:$0xff]
    %v554 = vld [vmem:[%s3 + $0x48] sm:$0xff]
    %v555 = vld [vmem:[%s3 + $0x50] sm:$0xff]
    %v556 = vld [vmem:[%s3 + $0x58] sm:$0xff]
    %v557 = vld [vmem:[%s3 + $0x60] sm:$0xff]
    %v558 = vld [vmem:[%s3 + $0x68] sm:$0xff]
    %v559 = vld [vmem:[%s3 + $0x70] sm:$0xff]
    %v560 = vld [vmem:[%s3 + $0x78] sm:$0xff]
    %v561 = vld [vmem:[%s3 + $0x80] sm:$0xff]
    %v562 = vld [vmem:[%s3 + $0x88] sm:$0xff]
    %v563 = vld [vmem:[%s3 + $0x90] sm:$0xff]
    %v564 = vld [vmem:[%s3 + $0x98] sm:$0xff]
    %v565 = vld [vmem:[%s3 + $0xa0] sm:$0xff]
    %v566 = vld [vmem:[%s3 + $0xa8] sm:$0xff]
    %v567 = vld [vmem:[%s3 + $0xb0] sm:$0xff]
    %v568 = vld [vmem:[%s3 + $0xb8] sm:$0xff]
    %v569 = vld [vmem:[%s3 + $0xc0] sm:$0xff]
    %v570 = vld [vmem:[%s3 + $0xc8] sm:$0xff]
    %v571 = vld [vmem:[%s3 + $0xd0] sm:$0xff]
    %v572 = vld [vmem:[%s3 + $0xd8] sm:$0xff]
    %v573 = vld [vmem:[%s3 + $0xe0] sm:$0xff]
    %v574 = vld [vmem:[%s3 + $0xe8] sm:$0xff]
    %v575 = vld [vmem:[%s4] sm:$0x1]
    %v577 = vlaneseq
    %v578 = vshrl.u32 %v577, 7
    %v579 = vsub.s32 0, %v578
    %v580 = vrot.slane %v575, %v579
    %v584 = vunpack.c.l.s4 1983009808
    %v585 = vunpack.c.0.s8 %v584
    %v586 = vlaneseq
    %v587 = vshrl.u32 %v586, 7
    %v588 = vsub.s32 %v585, %v587
    %v589 = vrot.slane %v425, %v588
    %v590 = vcombine.high %v589, %v589
    %593 = vmatprep.subr.mxu0 0.0
    %594 = vmatpush1.xpose.msra.mxu0 0.0
    %595 = vmatprep.subr.mxu0 %v574
    %596 = vmatpush1.xpose.msra.mxu0 %v573
    %597 = vmatprep.subr.mxu0 %v572
    %598 = vmatpush1.xpose.msra.mxu0 %v571
    %599 = vmatprep.subr.mxu0 %v570
    %600 = vmatpush1.xpose.msra.mxu0 %v569
    %601 = vmatprep.subr.mxu0 %v568
    %602 = vmatpush1.xpose.msra.mxu0 %v567
    %603 = vmatprep.subr.mxu0 %v566
    %604 = vmatpush1.xpose.msra.mxu0 %v565
    %605 = vmatprep.subr.mxu0 %v564
    %606 = vmatpush1.xpose.msra.mxu0 %v563
    %607 = vmatprep.subr.mxu0 %v562
    %608 = vmatpush1.xpose.msra.mxu0 %v561
    %609 = vmatprep.subr.mxu0 %v560
    %610 = vmatpush1.xpose.msra.mxu0 %v559
    %611 = vmatprep.subr.mxu0 %v558
    %612 = vmatpush1.xpose.msra.mxu0 %v557
    %613 = vmatprep.subr.mxu0 %v556
    %614 = vmatpush1.xpose.msra.mxu0 %v555
    %615 = vmatprep.subr.mxu0 %v554
    %616 = vmatpush1.xpose.msra.mxu0 %v553
    %617 = vmatprep.subr.mxu0 %v552
    %618 = vmatpush1.xpose.msra.mxu0 %v551
    %619 = vmatprep.subr.mxu0 %v550
    %620 = vmatpush1.xpose.msra.mxu0 %v549
    %621 = vmatprep.subr.mxu0 %v548
    %622 = vmatpush1.xpose.msra.mxu0 %v547
    %623 = vmatprep.subr.mxu0 %v546
    %624 = vmatpush1.xpose.msra.mxu0 %v545
    %625 = vmatprep.subr.mxu0 0.0
    %626 = vmatpush2.xpose.msra.mxu0 0.0
    %627 = vmatprep.subr.mxu0 0.0
    %628 = vmatpush2.xpose.msra.mxu0 0.0
    %629 = vmatprep.subr.mxu0 0.0
    %630 = vmatpush2.xpose.msra.mxu0 0.0
    %631 = vmatprep.subr.mxu0 0.0
    %632 = vmatpush2.xpose.msra.mxu0 0.0
    %633 = vmatprep.subr.mxu0 0.0
    %634 = vmatpush2.xpose.msra.mxu0 0.0
    %635 = vmatprep.subr.mxu0 0.0
    %636 = vmatpush2.xpose.msra.mxu0 0.0
    %637 = vmatprep.subr.mxu0 0.0
    %638 = vmatpush2.xpose.msra.mxu0 0.0
    %639 = vmatprep.subr.mxu0 0.0
    %640 = vmatpush2.xpose.msra.mxu0 0.0
    %641 = vmatprep.subr.mxu0 0.0
    %642 = vmatpush2.xpose.msra.mxu0 0.0
    %643 = vmatprep.subr.mxu0 0.0
    %644 = vmatpush2.xpose.msra.mxu0 0.0
    %645 = vmatprep.subr.mxu0 0.0
    %646 = vmatpush2.xpose.msra.mxu0 0.0
    %647 = vmatprep.subr.mxu0 0.0
    %648 = vmatpush2.xpose.msra.mxu0 0.0
    %649 = vmatprep.subr.mxu0 0.0
    %650 = vmatpush2.xpose.msra.mxu0 0.0
    %651 = vmatprep.subr.mxu0 0.0
    %652 = vmatpush2.xpose.msra.mxu0 0.0
    %653 = vmatprep.subr.mxu0 0.0
    %654 = vmatpush2.xpose.msra.mxu0 0.0
    %655 = vmatprep.subr.mxu0 0.0
    %656 = vmatpush2.xpose.msra.mxu0 0.0
    %657 = vmatprep.mubr.f32.mxu0 %v590
    %658 = vmatmul.mubr.f32.gmra.mxu0 %v589
    %v659 = vpop.f32.mrf.mxu0
    %v660 = vadd.f32 %v580, %v659
    %v661 = vpop.f32.mrf.mxu0
    %662 = vdwg.mxu0
    %v663 = vmax.f32 %v660, 0.0
    %vm664 = vcmp.eq.f32.partialorder %v663, 0.0
    %v665 = vsel %vm664, 1, 0
    %vm666 = vmpackc.low %vm664, %vm664
    %vm667 = vmpackc.even %vm666, %vm666
    %v668 = vsel %vm667, 16843009, 0
    %vm669 = vcmask 974848
    %vm670 = vmand %vm669, %vm483
    %v671 = vld [vmem:[%s12] sm:$0x1]
    %v672 = vsel %vm670, %v668, %v671
    %673 = vst [vmem:[%s12] sm:$0x1] %v672
    %vm674 = vcmask 975872
    %v675 = vsel %vm674, %v665, 0
    %v676 = vand.u32 %v675, 65535
    %v677 = vshrl.u32 %v675, 16
    %v678 = vcvt.s32.f32 %v676
    %v679 = vcvt.s32.f32 %v677
    %680 = vadd.xlane.f32.xlu0 %v678
    %v681 = vpop.xlane.xlu0 %680
    %682 = vadd.xlane.f32.xlu0 %v679
    %v683 = vpop.xlane.xlu0 %682
    %v684 = vcvt.f32.s32 %v681
    %v685 = vcvt.f32.s32 %v683
    %v686 = vshll.u32 %v685, 16
    %v687 = vadd.s32 %v686, %v684
    %v688 = vrot.slane %v687, 4
    %v689 = vadd.s32 %v687, %v688
    %v690 = vrot.slane %v689, 2
    %v691 = vadd.s32 %v689, %v690
    %v692 = vrot.slane %v691, 1
    %v693 = vadd.s32 %v691, %v692
    %s694 = vtos %v693
    %s695 = scalar_lea.smem [#allocation6], 2
    %696 = sst [smem:[%s695]] %s694
    %v697 = vmul.f32 %v663, 0.5
    %v698 = vtanh.pop %v697
    %v699 = vsel %vm674, %v698, 0.0
    %700 = vadd.xlane.f32.xlu0 %v699
    %v701 = vpop.xlane.xlu0 %700
    %v702 = vrot.slane %v701, 4
    %v703 = vadd.f32 %v701, %v702
    %v704 = vrot.slane %v703, 2
    %v705 = vadd.f32 %v703, %v704
    %v706 = vrot.slane %v705, 1
    %v707 = vadd.f32 %v705, %v706
    %s708 = vtos %v707
    %s709 = scalar_lea.smem [#allocation7], 2
    %710 = sst [smem:[%s709]] %s708
    %v711 = vld [vmem:[%s5] sm:$0xff]
    %v712 = vld [vmem:[%s5 + $0x8] sm:$0xff]
    %v713 = vld [vmem:[%s5 + $0x10] sm:$0xff]
    %v714 = vld [vmem:[%s5 + $0x18] sm:$0xff]
    %v715 = vld [vmem:[%s5 + $0x20] sm:$0xff]
    %v716 = vld [vmem:[%s5 + $0x28] sm:$0xff]
    %v717 = vld [vmem:[%s5 + $0x30] sm:$0xff]
    %v718 = vld [vmem:[%s5 + $0x38] sm:$0xff]
    %v719 = vld [vmem:[%s5 + $0x40] sm:$0xff]
    %v720 = vld [vmem:[%s5 + $0x48] sm:$0xff]
    %v721 = vld [vmem:[%s5 + $0x50] sm:$0xf]
    %v722 = vld [vmem:[%s6] sm:$0x1]
    %v724 = vlaneseq
    %v725 = vshrl.u32 %v724, 7
    %v726 = vsub.s32 0, %v725
    %v727 = vrot.slane %v722, %v726
    %vm729 = vcmask 982016
    %v731 = vsel %vm729, %v663, 0
    %v734 = vsel %vm729, %v711, 0
    %v737 = vsel %vm729, %v712, 0
    %v740 = vsel %vm729, %v713, 0
    %v743 = vsel %vm729, %v714, 0
    %v746 = vsel %vm729, %v715, 0
    %v749 = vsel %vm729, %v716, 0
    %v752 = vsel %vm729, %v717, 0
    %v755 = vsel %vm729, %v718, 0
    %v758 = vsel %vm729, %v719, 0
    %v761 = vsel %vm729, %v720, 0
    %v764 = vsel %vm729, %v721, 0
    %766 = vmatprep.subr.mxu0 0.0
    %767 = vmatpush1.xpose.msra.mxu0 0.0
    %768 = vmatprep.subr.mxu0 0.0
    %769 = vmatpush1.xpose.msra.mxu0 0.0
    %770 = vmatprep.subr.mxu0 0.0
    %771 = vmatpush1.xpose.msra.mxu0 0.0
    %772 = vmatprep.subr.mxu0 0.0
    %773 = vmatpush1.xpose.msra.mxu0 0.0
    %774 = vmatprep.subr.mxu0 0.0
    %775 = vmatpush1.xpose.msra.mxu0 0.0
    %776 = vmatprep.subr.mxu0 0.0
    %777 = vmatpush1.xpose.msra.mxu0 %v764
    %778 = vmatprep.subr.mxu0 0.0
    %779 = vmatpush1.xpose.msra.mxu0 %v761
    %780 = vmatprep.subr.mxu0 0.0
    %781 = vmatpush1.xpose.msra.mxu0 %v758
    %782 = vmatprep.subr.mxu0 0.0
    %783 = vmatpush1.xpose.msra.mxu0 %v755
    %784 = vmatprep.subr.mxu0 0.0
    %785 = vmatpush1.xpose.msra.mxu0 %v752
    %786 = vmatprep.subr.mxu0 0.0
    %787 = vmatpush1.xpose.msra.mxu0 %v749
    %788 = vmatprep.subr.mxu0 0.0
    %789 = vmatpush1.xpose.msra.mxu0 %v746
    %790 = vmatprep.subr.mxu0 0.0
    %791 = vmatpush1.xpose.msra.mxu0 %v743
    %792 = vmatprep.subr.mxu0 0.0
    %793 = vmatpush1.xpose.msra.mxu0 %v740
    %794 = vmatprep.subr.mxu0 0.0
    %795 = vmatpush1.xpose.msra.mxu0 %v737
    %796 = vmatprep.subr.mxu0 0.0
    %797 = vmatpush1.xpose.msra.mxu0 %v734
    %798 = vmatprep.subr.mxu0 0.0
    %799 = vmatpush2.xpose.msra.mxu0 0.0
    %800 = vmatprep.subr.mxu0 0.0
    %801 = vmatpush2.xpose.msra.mxu0 0.0
    %802 = vmatprep.subr.mxu0 0.0
    %803 = vmatpush2.xpose.msra.mxu0 0.0
    %804 = vmatprep.subr.mxu0 0.0
    %805 = vmatpush2.xpose.msra.mxu0 0.0
    %806 = vmatprep.subr.mxu0 0.0
    %807 = vmatpush2.xpose.msra.mxu0 0.0
    %808 = vmatprep.subr.mxu0 0.0
    %809 = vmatpush2.xpose.msra.mxu0 0.0
    %810 = vmatprep.subr.mxu0 0.0
    %811 = vmatpush2.xpose.msra.mxu0 0.0
    %812 = vmatprep.subr.mxu0 0.0
    %813 = vmatpush2.xpose.msra.mxu0 0.0
    %814 = vmatprep.subr.mxu0 0.0
    %815 = vmatpush2.xpose.msra.mxu0 0.0
    %816 = vmatprep.subr.mxu0 0.0
    %817 = vmatpush2.xpose.msra.mxu0 0.0
    %818 = vmatprep.subr.mxu0 0.0
    %819 = vmatpush2.xpose.msra.mxu0 0.0
    %820 = vmatprep.subr.mxu0 0.0
    %821 = vmatpush2.xpose.msra.mxu0 0.0
    %822 = vmatprep.subr.mxu0 0.0
    %823 = vmatpush2.xpose.msra.mxu0 0.0
    %824 = vmatprep.subr.mxu0 0.0
    %825 = vmatpush2.xpose.msra.mxu0 0.0
    %826 = vmatprep.subr.mxu0 0.0
    %827 = vmatpush2.xpose.msra.mxu0 0.0
    %828 = vmatprep.subr.mxu0 0.0
    %829 = vmatpush2.xpose.msra.mxu0 0.0
    %830 = vmatprep.mubr.f32.mxu0 0.0
    %831 = vmatmul.mubr.f32.gmra.mxu0 %v731
    %v832 = vpop.f32.mrf.mxu0
    %v833 = vadd.f32 %v727, %v832
    %v834 = vpop.f32.mrf.mxu0
    %835 = vdwg.mxu0
    %v836 = vmax.f32 %v833, 0.0
    %vm837 = vcmp.eq.f32.partialorder %v836, 0.0
    %v838 = vsel %vm837, 1, 0
    %vm839 = vmpackc.low %vm837, %vm837
    %vm840 = vmpackc.even %vm839, %vm839
    %v841 = vsel %vm840, 16843009, 0
    %vm842 = vcmask 679936
    %vm843 = vmand %vm842, %vm483
    %v844 = vld [vmem:[%s13] sm:$0x1]
    %v845 = vsel %vm843, %v841, %v844
    %846 = vst [vmem:[%s13] sm:$0x1] %v845
    %vm847 = vcmask 680960
    %v848 = vsel %vm847, %v838, 0
    %v849 = vand.u32 %v848, 65535
    %v850 = vshrl.u32 %v848, 16
    %v851 = vcvt.s32.f32 %v849
    %v852 = vcvt.s32.f32 %v850
    %853 = vadd.xlane.f32.xlu0 %v851
    %v854 = vpop.xlane.xlu0 %853
    %855 = vadd.xlane.f32.xlu0 %v852
    %v856 = vpop.xlane.xlu0 %855
    %v857 = vcvt.f32.s32 %v854
    %v858 = vcvt.f32.s32 %v856
    %v859 = vshll.u32 %v858, 16
    %v860 = vadd.s32 %v859, %v857
    %v861 = vrot.slane %v860, 4
    %v862 = vadd.s32 %v860, %v861
    %v863 = vrot.slane %v862, 2
    %v864 = vadd.s32 %v862, %v863
    %v865 = vrot.slane %v864, 1
    %v866 = vadd.s32 %v864, %v865
    %s867 = vtos %v866
    %s868 = scalar_lea.smem [#allocation6], 3
    %869 = sst [smem:[%s868]] %s867
    %v870 = vmul.f32 %v836, 0.5
    %v871 = vtanh.pop %v870
    %v872 = vsel %vm847, %v871, 0.0
    %873 = vadd.xlane.f32.xlu0 %v872
    %v874 = vpop.xlane.xlu0 %873
    %v875 = vrot.slane %v874, 4
    %v876 = vadd.f32 %v874, %v875
    %v877 = vrot.slane %v876, 2
    %v878 = vadd.f32 %v876, %v877
    %v879 = vrot.slane %v878, 1
    %v880 = vadd.f32 %v878, %v879
    %s881 = vtos %v880
    %s882 = scalar_lea.smem [#allocation7], 3
    %883 = sst [smem:[%s882]] %s881
    %v884 = vld [vmem:[%s7] sm:$0xff]
    %v885 = vld [vmem:[%s7 + $0x8] sm:$0x3]
    %v886 = vld [vmem:[%s8] sm:$0x1]
    %v888 = vlaneseq
    %v889 = vshrl.u32 %v888, 7
    %v890 = vsub.s32 0, %v889
    %v891 = vrot.slane %v886, %v890
    %vm893 = vcmask 687104
    %v895 = vsel %vm893, %v836, 0
    %v898 = vsel %vm893, %v884, 0
    %v901 = vsel %vm893, %v885, 0
    %903 = vmatprep.subr.mxu0 0.0
    %904 = vmatpush1.xpose.msra.mxu0 0.0
    %905 = vmatprep.subr.mxu0 0.0
    %906 = vmatpush1.xpose.msra.mxu0 0.0
    %907 = vmatprep.subr.mxu0 0.0
    %908 = vmatpush1.xpose.msra.mxu0 0.0
    %909 = vmatprep.subr.mxu0 0.0
    %910 = vmatpush1.xpose.msra.mxu0 0.0
    %911 = vmatprep.subr.mxu0 0.0
    %912 = vmatpush1.xpose.msra.mxu0 0.0
    %913 = vmatprep.subr.mxu0 0.0
    %914 = vmatpush1.xpose.msra.mxu0 0.0
    %915 = vmatprep.subr.mxu0 0.0
    %916 = vmatpush1.xpose.msra.mxu0 0.0
    %917 = vmatprep.subr.mxu0 0.0
    %918 = vmatpush1.xpose.msra.mxu0 0.0
    %919 = vmatprep.subr.mxu0 0.0
    %920 = vmatpush1.xpose.msra.mxu0 0.0
    %921 = vmatprep.subr.mxu0 0.0
    %922 = vmatpush1.xpose.msra.mxu0 0.0
    %923 = vmatprep.subr.mxu0 0.0
    %924 = vmatpush1.xpose.msra.mxu0 0.0
    %925 = vmatprep.subr.mxu0 0.0
    %926 = vmatpush1.xpose.msra.mxu0 0.0
    %927 = vmatprep.subr.mxu0 0.0
    %928 = vmatpush1.xpose.msra.mxu0 0.0
    %929 = vmatprep.subr.mxu0 0.0
    %930 = vmatpush1.xpose.msra.mxu0 0.0
    %931 = vmatprep.subr.mxu0 0.0
    %932 = vmatpush1.xpose.msra.mxu0 %v901
    %933 = vmatprep.subr.mxu0 0.0
    %934 = vmatpush1.xpose.msra.mxu0 %v898
    %935 = vmatprep.subr.mxu0 0.0
    %936 = vmatpush2.xpose.msra.mxu0 0.0
    %937 = vmatprep.subr.mxu0 0.0
    %938 = vmatpush2.xpose.msra.mxu0 0.0
    %939 = vmatprep.subr.mxu0 0.0
    %940 = vmatpush2.xpose.msra.mxu0 0.0
    %941 = vmatprep.subr.mxu0 0.0
    %942 = vmatpush2.xpose.msra.mxu0 0.0
    %943 = vmatprep.subr.mxu0 0.0
    %944 = vmatpush2.xpose.msra.mxu0 0.0
    %945 = vmatprep.subr.mxu0 0.0
    %946 = vmatpush2.xpose.msra.mxu0 0.0
    %947 = vmatprep.subr.mxu0 0.0
    %948 = vmatpush2.xpose.msra.mxu0 0.0
    %949 = vmatprep.subr.mxu0 0.0
    %950 = vmatpush2.xpose.msra.mxu0 0.0
    %951 = vmatprep.subr.mxu0 0.0
    %952 = vmatpush2.xpose.msra.mxu0 0.0
    %953 = vmatprep.subr.mxu0 0.0
    %954 = vmatpush2.xpose.msra.mxu0 0.0
    %955 = vmatprep.subr.mxu0 0.0
    %956 = vmatpush2.xpose.msra.mxu0 0.0
    %957 = vmatprep.subr.mxu0 0.0
    %958 = vmatpush2.xpose.msra.mxu0 0.0
    %959 = vmatprep.subr.mxu0 0.0
    %960 = vmatpush2.xpose.msra.mxu0 0.0
    %961 = vmatprep.subr.mxu0 0.0
    %962 = vmatpush2.xpose.msra.mxu0 0.0
    %963 = vmatprep.subr.mxu0 0.0
    %964 = vmatpush2.xpose.msra.mxu0 0.0
    %965 = vmatprep.subr.mxu0 0.0
    %966 = vmatpush2.xpose.msra.mxu0 0.0
    %967 = vmatprep.mubr.f32.mxu0 0.0
    %968 = vmatmul.mubr.f32.gmra.mxu0 %v895
    %v969 = vpop.f32.mrf.mxu0
    %v970 = vadd.f32 %v891, %v969
    %v971 = vpop.f32.mrf.mxu0
    %972 = vdwg.mxu0
    %v973 = vmax.f32 %v970, 0.0
    %vm974 = vcmp.eq.f32.partialorder %v973, 0.0
    %v975 = vsel %vm974, 1, 0
    %vm976 = vmpackc.low %vm974, %vm974
    %vm977 = vmpackc.even %vm976, %vm976
    %v978 = vsel %vm977, 16843009, 0
    %vm979 = vcmask 73728
    %vm980 = vmand %vm979, %vm483
    %v981 = vld [vmem:[%s14] sm:$0x1]
    %v982 = vsel %vm980, %v978, %v981
    %983 = vst [vmem:[%s14] sm:$0x1] %v982
    %vm984 = vcmask 74752
    %v985 = vsel %vm984, %v975, 0
    %v986 = vand.u32 %v985, 65535
    %v987 = vshrl.u32 %v985, 16
    %v988 = vcvt.s32.f32 %v986
    %v989 = vcvt.s32.f32 %v987
    %990 = vadd.xlane.f32.xlu0 %v988
    %v991 = vpop.xlane.xlu0 %990
    %992 = vadd.xlane.f32.xlu0 %v989
    %v993 = vpop.xlane.xlu0 %992
    %v994 = vcvt.f32.s32 %v991
    %v995 = vcvt.f32.s32 %v993
    %v996 = vshll.u32 %v995, 16
    %v997 = vadd.s32 %v996, %v994
    %v998 = vrot.slane %v997, 4
    %v999 = vadd.s32 %v997, %v998
    %v1000 = vrot.slane %v999, 2
    %v1001 = vadd.s32 %v999, %v1000
    %v1002 = vrot.slane %v1001, 1
    %v1003 = vadd.s32 %v1001, %v1002
    %s1004 = vtos %v1003
    %s1005 = scalar_lea.smem [#allocation6], 4
    %1006 = sst [smem:[%s1005]] %s1004
    %v1007 = vmul.f32 %v973, 0.5
    %v1008 = vtanh.pop %v1007
    %v1009 = vsel %vm984, %v1008, 0.0
    %1010 = vadd.xlane.f32.xlu0 %v1009
    %v1011 = vpop.xlane.xlu0 %1010
    %v1012 = vrot.slane %v1011, 4
    %v1013 = vadd.f32 %v1011, %v1012
    %v1014 = vrot.slane %v1013, 2
    %v1015 = vadd.f32 %v1013, %v1014
    %v1016 = vrot.slane %v1015, 1
    %v1017 = vadd.f32 %v1015, %v1016
    %s1018 = vtos %v1017
    %s1019 = scalar_lea.smem [#allocation7], 4
    %1020 = sst [smem:[%s1019]] %s1018
    %1021 = vst.msk [vmem:[#allocation3] sm:$0x3] %vm984, %v973
    // Predicated region
    $region38: #{lenet5_forward.3} parent=1 // pred_check
      _
    $region39: #{lenet5_forward.3} parent=1 // pred_check_branch
      %1023 = sbr.rel (0) target = $region41
    $region40: #{lenet5_forward.3} parent=1 // pred_region
      %s1025 = ssub.s32 32, 32
      %1026 = vsyncadd [#allocation4], %s1025
      %s1028 = sshll.u32 [#allocation3], 4
      %s1029 = int_to_ptr.vmem [resolvable:$true] %s1028
      %1031 = dma.vmem_to_hbm [thread:$0]  %s1029, 32, %s9, [#allocation4]
    $region41: #{lenet5_forward.3} parent=1 // pred_fallthru
      _
    // Predicated region
    $region42: #{lenet5_forward.3} parent=1 // pred_check
      _
    $region43: #{lenet5_forward.3} parent=1 // pred_check_branch
      %1033 = sbr.rel (0) target = $region45
    $region44: #{lenet5_forward.3} parent=1 // pred_region
      _
    $region45: #{lenet5_forward.3} parent=1 // pred_fallthru
      _
    // Predicated region
    $region46: #{lenet5_forward.3} parent=1 // pred_check
      _
    $region47: #{lenet5_forward.3} parent=1 // pred_check_branch
      %1035 = sbr.rel (0) target = $region49
    $region48: #{lenet5_forward.3} parent=1 // pred_region
      _
    $region49: #{lenet5_forward.3} parent=1 // pred_fallthru
      _
    // Predicated region
    $region50: #{lenet5_forward.3} parent=1 // pred_check
      _
    $region51: #{lenet5_forward.3} parent=1 // pred_check_branch
      %1037 = sbr.rel (0) target = $region53
    $region52: #{lenet5_forward.3} parent=1 // pred_region
      _
    $region53: #{lenet5_forward.3} parent=1 // pred_fallthru
      _
    // Predicated region
    $region54: #{lenet5_forward.3} parent=1 // pred_check
      _
    $region55: #{lenet5_forward.3} parent=1 // pred_check_branch
      %1039 = sbr.rel (0) target = $region57
    $region56: #{lenet5_forward.3} parent=1 // pred_region
      _
    $region57: #{lenet5_forward.3} parent=1 // pred_fallthru
      _
    // Predicated region
    $region58: #{lenet5_forward.3} parent=1 // pred_check
      _
    $region59: #{lenet5_forward.3} parent=1 // pred_check_branch
      %1041 = sbr.rel (0) target = $region61
    $region60: #{lenet5_forward.3} parent=1 // pred_region
      _
    $region61: #{lenet5_forward.3} parent=1 // pred_fallthru
      _
    // Predicated region
    $region62: #{lenet5_forward.3} parent=1 // pred_check
      _
    $region63: #{lenet5_forward.3} parent=1 // pred_check_branch
      %1043 = sbr.rel (0) target = $region65
    $region64: #{lenet5_forward.3} parent=1 // pred_region
      %s1045 = ssub.s32 16, 16
      %1046 = vsyncadd [#allocation5], %s1045
      %s1048 = sshll.u32 %s15, 4
      %s1049 = int_to_ptr.vmem [resolvable:$true] %s1048
      %1051 = dma.smem_to_vmem [#allocation6], 16, %s1049, [#allocation5]
    $region65: #{lenet5_forward.3} parent=1 // pred_fallthru
      _
    // Predicated region
    $region66: #{lenet5_forward.3} parent=1 // pred_check
      _
    $region67: #{lenet5_forward.3} parent=1 // pred_check_branch
      %1053 = sbr.rel (0) target = $region69
    $region68: #{lenet5_forward.3} parent=1 // pred_region
      %s1055 = ssub.s32 16, 16
      %1056 = vsyncadd [#allocation8], %s1055
      %s1058 = sshll.u32 %s16, 4
      %s1059 = int_to_ptr.vmem [resolvable:$true] %s1058
      %1061 = dma.smem_to_vmem [#allocation7], 16, %s1059, [#allocation8]
    $region69: #{lenet5_forward.3} parent=1 // pred_fallthru
      _
    // Predicated region
    $region70: #{lenet5_forward.3} parent=1 // pred_check
      _
    $region71: #{lenet5_forward.3} parent=1 // pred_check_branch
      %1063 = sbr.rel (0) target = $region73
    $region72: #{lenet5_forward.3} parent=1 // pred_region
      %1064 = dma.done [#allocation4], 32
    $region73: #{lenet5_forward.3} parent=1 // pred_fallthru
      _
    // Predicated region
    $region74: #{lenet5_forward.3} parent=1 // pred_check
      _
    $region75: #{lenet5_forward.3} parent=1 // pred_check_branch
      %1066 = sbr.rel (0) target = $region77
    $region76: #{lenet5_forward.3} parent=1 // pred_region
      _
    $region77: #{lenet5_forward.3} parent=1 // pred_fallthru
      _
    // Predicated region
    $region78: #{lenet5_forward.3} parent=1 // pred_check
      _
    $region79: #{lenet5_forward.3} parent=1 // pred_check_branch
      %1068 = sbr.rel (0) target = $region81
    $region80: #{lenet5_forward.3} parent=1 // pred_region
      _
    $region81: #{lenet5_forward.3} parent=1 // pred_fallthru
      _
    // Predicated region
    $region82: #{lenet5_forward.3} parent=1 // pred_check
      _
    $region83: #{lenet5_forward.3} parent=1 // pred_check_branch
      %1070 = sbr.rel (0) target = $region85
    $region84: #{lenet5_forward.3} parent=1 // pred_region
      _
    $region85: #{lenet5_forward.3} parent=1 // pred_fallthru
      _
    // Predicated region
    $region86: #{lenet5_forward.3} parent=1 // pred_check
      _
    $region87: #{lenet5_forward.3} parent=1 // pred_check_branch
      %1072 = sbr.rel (0) target = $region89
    $region88: #{lenet5_forward.3} parent=1 // pred_region
      _
    $region89: #{lenet5_forward.3} parent=1 // pred_fallthru
      _
    // Predicated region
    $region90: #{lenet5_forward.3} parent=1 // pred_check
      _
    $region91: #{lenet5_forward.3} parent=1 // pred_check_branch
      %1074 = sbr.rel (0) target = $region93
    $region92: #{lenet5_forward.3} parent=1 // pred_region
      _
    $region93: #{lenet5_forward.3} parent=1 // pred_fallthru
      _
    // Predicated region
    $region94: #{lenet5_forward.3} parent=1 // pred_check
      _
    $region95: #{lenet5_forward.3} parent=1 // pred_check_branch
      %1076 = sbr.rel (0) target = $region97
    $region96: #{lenet5_forward.3} parent=1 // pred_region
      %1077 = dma.done [#allocation5], 16
    $region97: #{lenet5_forward.3} parent=1 // pred_fallthru
      _
    // Predicated region
    $region98: #{lenet5_forward.3} parent=1 // pred_check
      _
    $region99: #{lenet5_forward.3} parent=1 // pred_check_branch
      %1079 = sbr.rel (0) target = $region101
    $region100: #{lenet5_forward.3} parent=1 // pred_region
      %1080 = dma.done [#allocation8], 16
    $region101: #{lenet5_forward.3} parent=1 // pred_fallthru
      _
    %1081 = sfence
    %1082 = vsyncpa [#allocation4], 1
    %1083 = vsyncpa [#allocation5], 1
    %1084 = vsyncpa [#allocation8], 1

</llo_original>
